<compile_context>
chip_gen: v7x
topology: tpu7x:2x2x1
jax: 0.10.0
libtpu: 0.0.40
codegen_flags: <defaults>
</compile_context>

<pallas_src>
import functools
import math

import jax
import jax.numpy as jnp
from jax.experimental import pallas as pl
from jax.experimental.pallas import tpu as pltpu


def _round_up(x, m):
    return ((x + m - 1) // m) * m


def _cdiv(a, b):
    return -(-a // b)


def _sublane_multiple(dtype):
    size = jnp.dtype(dtype).itemsize
    if size >= 4:
        return 8
    if size == 2:
        return 16
    return 32


def _vmem_limits():
    """Generation-aware VMEM working-set budget and scoped-VMEM limit."""
    cap = 64 * 1024 * 1024  # conservative default (v7x per-TensorCore VMEM)
    try:
        info = pltpu.get_tpu_info()
        for name in ("vmem_capacity_bytes", "vmem_size_bytes", "vmem_bytes"):
            v = getattr(info, name, None)
            if v:
                cap = int(v)
                break
    except Exception:
        pass
    budget = max(16 * 1024 * 1024, min(cap // 3, 40 * 1024 * 1024))
    limit = max(budget + 8 * 1024 * 1024, min(cap * 3 // 4, 96 * 1024 * 1024))
    return budget, int(limit)


def _inverse_overlap_counts(sig_length, width, nframes, frame_shift, frame_size):
    """(1, width) reciprocal overlap counts, computed once in plain JAX."""
    t = jnp.arange(sig_length, dtype=jnp.int32)
    hi = jnp.minimum(t // frame_shift, nframes - 1)
    lo = jnp.maximum((t - frame_size) // frame_shift + 1, 0)
    cnt = jnp.maximum(hi - lo + 1, 0).astype(jnp.float32)
    inv = jnp.where(cnt > 0, 1.0 / jnp.maximum(cnt, 1.0), 0.0)
    return jnp.pad(inv, (0, width - sig_length)).reshape(1, width)


# ------------------------------------------------------------------ kernels --
def _ola_banded_matmul_kernel(xh_ref, xl_ref, s_ref, inv_ref, o_ref, acc_ref, *,
                              nd, n_sb):
    # xh/xl: (1, TR, KB) bf16 hi/lo halves of one frame super-block
    # s_ref: (KB, TS)    bf16 0/1 scatter strip slice for spill step d
    # inv:   (1, TS)     reciprocal overlap counts
    # o_ref: (TR, TS)    output tile; acc_ref: (TR, TS) f32 accumulator
    c = pl.program_id(1)
    d = pl.program_id(2)

    @pl.when(d == 0)
    def _init():
        acc_ref[...] = jnp.zeros_like(acc_ref)

    g = c - d  # contributing super-block

    @pl.when(jnp.logical_and(g >= 0, g < n_sb))
    def _accumulate():
        s = s_ref[...]
        # Exact bf16 hi/lo split + 0/1 scatter + f32 MXU accumulation ->
        # ~1e-6 relative accuracy with single-pass bf16 matmuls (no HIGHEST).
        acc_ref[...] += (
            jnp.dot(xh_ref[0], s, preferred_element_type=jnp.float32)
            + jnp.dot(xl_ref[0], s, preferred_element_type=jnp.float32))

    @pl.when(d == nd - 1)
    def _finalize():
        o_ref[...] = (acc_ref[...] * inv_ref[...]).astype(o_ref.dtype)


def _ola_slice_kernel(x_ref, inv_ref, o_ref, acc_ref, *, frame_shift, ts, nd,
                      n_sb, segment_sums):
    # x_ref: (1, TR, FPT, frame_size) lane-aligned frames of one super-block
    # inv:   (1, TS); o_ref: (TR, TS); acc_ref: (TR, TS) f32 accumulator
    c = pl.program_id(1)
    d = pl.program_id(2)
    fpt = x_ref.shape[2]
    frame_size = x_ref.shape[3]

    @pl.when(d == 0)
    def _init():
        acc_ref[...] = jnp.zeros_like(acc_ref)

    for dd in range(nd):  # static unroll over spill steps -> static slice offsets
        if segment_sums:
            # frame_size % frame_shift == 0: every frame either fully covers a
            # frame_shift-wide segment or misses it -> sum contributions per
            # segment in registers, one accumulator RMW per segment.
            plan = []
            for s in range(fpt):
                srcs = []
                for i in range(fpt):
                    j0 = (s - i) * frame_shift + dd * ts
                    if 0 <= j0 <= frame_size - frame_shift:
                        srcs.append((i, j0))
                if srcs:
                    plan.append((s, srcs))
        else:
            plan = []
            for i in range(fpt):
                off = i * frame_shift - dd * ts
                lo, hi = max(off, 0), min(off + frame_size, ts)
                if hi > lo:
                    plan.append((i, off, lo, hi))
        if not plan:
            continue

        valid = jnp.logical_and(d == dd,
                                jnp.logical_and(c >= dd, c - dd < n_sb))

        @pl.when(valid)
        def _accumulate(plan=plan):
            if segment_sums:
                for s, srcs in plan:
                    i0, j0 = srcs[0]
                    total = x_ref[0, :, i0, j0:j0 + frame_shift].astype(jnp.float32)
                    for i, j in srcs[1:]:
                        total = total + x_ref[0, :, i, j:j + frame_shift].astype(
                            jnp.float32)
                    a = s * frame_shift
                    acc_ref[:, a:a + frame_shift] += total
            else:
                for i, off, lo, hi in plan:
                    acc_ref[:, lo:hi] += x_ref[0, :, i, lo - off:hi - off].astype(
                        jnp.float32)

    @pl.when(d == nd - 1)
    def _finalize():
        o_ref[...] = (acc_ref[...] * inv_ref[...]).astype(o_ref.dtype)


def _ola_dense_matmul_kernel(xh_ref, xl_ref, s_ref, inv_ref, o_ref):
    # Fallback: full-K scatter matmul per signal tile.
    s = s_ref[...]
    acc = (jnp.dot(xh_ref[...], s, preferred_element_type=jnp.float32)
           + jnp.dot(xl_ref[...], s, preferred_element_type=jnp.float32))
    o_ref[...] = (acc * inv_ref[...]).astype(o_ref.dtype)


# -------------------------------------------------------------------- paths --
def _split_bf16(x_f32):
    x_hi = x_f32.astype(jnp.bfloat16)
    x_lo = (x_f32 - x_hi.astype(jnp.float32)).astype(jnp.bfloat16)
    return x_hi, x_lo


def _ola_aligned_path(x, rows, nframes, frame_shift, frame_size, sig_length,
                      dtype, budget, vmem_limit):
    itemsize = jnp.dtype(dtype).itemsize
    sub = _sublane_multiple(dtype)
    rows_pad = _round_up(rows, sub)

    # Signal-tile width: multiple of frame_shift (itself a multiple of 128);
    # aim for >= 1024 columns and >= frame_size - frame_shift (keeps the spill
    # count ND at 2 so each super-block is fetched at most ~twice).
    target = max(1024, frame_size - frame_shift)
    fpt = max(1, min(_cdiv(target, frame_shift), nframes))

    def step_bytes(tr_, fpt_, ts_):
        return (2 * tr_ * fpt_ * frame_size * itemsize   # x block (double-buffered)
                + 2 * ts_ * 4                            # inv block
                + tr_ * ts_ * 4                          # acc scratch
                + 2 * tr_ * ts_ * itemsize)              # out block

    ts = fpt * frame_shift
    while step_bytes(sub, fpt, ts) > budget and fpt > 1:
        fpt = max(1, fpt // 2)
        ts = fpt * frame_shift

    nd = _cdiv(ts + frame_size - frame_shift, ts)
    n_sb = _cdiv(nframes, fpt)
    n_tiles = n_sb + nd - 1
    width = n_tiles * ts

    tr = _round_up(min(rows_pad, 256), sub)
    while step_bytes(tr, fpt, ts) > budget and tr > sub:
        tr = max(sub, _round_up(tr // 2, sub))
    rows_pad = _round_up(rows_pad, tr)

    xp = x
    pad_r, pad_f = rows_pad - rows, n_sb * fpt - nframes
    if pad_r or pad_f:
        xp = jnp.pad(x, ((0, pad_r), (0, pad_f), (0, 0)))
    # Super-block axis leading so frame windows are plain blocked index maps.
    x4 = xp.reshape(rows_pad, n_sb, fpt, frame_size).transpose(1, 0, 2, 3)

    inv = _inverse_overlap_counts(sig_length, width, nframes, frame_shift,
                                  frame_size)

    kernel = functools.partial(
        _ola_slice_kernel, frame_shift=frame_shift, ts=ts, nd=nd, n_sb=n_sb,
        segment_sums=(frame_size % frame_shift == 0))

    out = pl.pallas_call(
        kernel,
        out_shape=jax.ShapeDtypeStruct((rows_pad, width), dtype),
        grid_spec=pltpu.PrefetchScalarGridSpec(
            num_scalar_prefetch=0,
            grid=(rows_pad // tr, n_tiles, nd),
            in_specs=[
                pl.BlockSpec((1, tr, fpt, frame_size),
                             lambda r, c, d: (jnp.clip(c - d, 0, n_sb - 1), r, 0, 0)),
                pl.BlockSpec((1, ts), lambda r, c, d: (0, c)),
            ],
            out_specs=pl.BlockSpec((tr, ts), lambda r, c, d: (r, c)),
            scratch_shapes=[pltpu.VMEM((tr, ts), jnp.float32)],
        ),
        compiler_params=pltpu.CompilerParams(
            dimension_semantics=("parallel", "parallel", "arbitrary"),
            vmem_limit_bytes=vmem_limit,
        ),
    )(x4, inv)
    return out[:rows, :sig_length]


def _ola_banded_matmul_path(x, rows, nframes, frame_shift, frame_size,
                            sig_length, dtype, budget, vmem_limit, ts_mult):
    itemsize = jnp.dtype(dtype).itemsize
    sub = max(_sublane_multiple(dtype), 16)  # x hi/lo operands are bf16
    rows_pad = _round_up(rows, sub)

    # Signal-tile width: multiple of lcm(128, frame_shift); grow toward
    # ~1024 columns (and >= frame_size) while the scatter block fits VMEM.
    sig_cap = max(ts_mult, _round_up(sig_length, ts_mult))

    def s_block_bytes(ts_):
        return (ts_ // frame_shift) * frame_size * ts_ * 2  # bf16 scatter block

    ts = ts_mult
    while (ts * 2 <= min(max(1024, frame_size), sig_cap)
           and s_block_bytes(ts * 2) <= budget // 4):
        ts *= 2

    fpt = ts // frame_shift
    kb = fpt * frame_size
    nd = _cdiv(ts + frame_size - frame_shift, ts)
    n_sb = _cdiv(nframes, fpt)
    n_tiles = n_sb + nd - 1
    width = n_tiles * ts

    def step_bytes(tr_):
        return (2 * 2 * tr_ * kb * 2       # xh + xl blocks (bf16, double-buffered)
                + 2 * kb * ts * 2          # scatter block (bf16)
                + 2 * ts * 4               # inv block
                + tr_ * ts * 4             # acc scratch
                + 2 * tr_ * ts * itemsize) # out block

    tr = _round_up(min(rows_pad, 256), sub)
    while step_bytes(tr) > budget and tr > sub:
        tr = max(sub, _round_up(tr // 2, sub))
    rows_pad = _round_up(rows_pad, tr)

    xf = x.astype(jnp.float32)
    pad_r, pad_f = rows_pad - rows, n_sb * fpt - nframes
    if pad_r or pad_f:
        xf = jnp.pad(xf, ((0, pad_r), (0, pad_f), (0, 0)))
    x3 = xf.reshape(rows_pad, n_sb, kb).transpose(1, 0, 2)  # (n_sb, rows_pad, KB)
    x_hi, x_lo = _split_bf16(x3)

    # Shared banded scatter strip: row (i*frame_size + j) -> column
    # (i*frame_shift + j) of the (KB, ND*TS) strip anchored at the
    # super-block's first signal tile.
    k_idx = jnp.arange(kb, dtype=jnp.int32)
    col = (k_idx // frame_size) * frame_shift + (k_idx % frame_size)
    scat = jnp.zeros((kb, nd * ts), dtype=jnp.bfloat16).at[k_idx, col].set(1)

    inv = _inverse_overlap_counts(sig_length, width, nframes, frame_shift,
                                  frame_size)

    kernel = functools.partial(_ola_banded_matmul_kernel, nd=nd, n_sb=n_sb)

    out = pl.pallas_call(
        kernel,
        out_shape=jax.ShapeDtypeStruct((rows_pad, width), dtype),
        grid_spec=pltpu.PrefetchScalarGridSpec(
            num_scalar_prefetch=0,
            grid=(rows_pad // tr, n_tiles, nd),
            in_specs=[
                pl.BlockSpec((1, tr, kb),
                             lambda r, c, d: (jnp.clip(c - d, 0, n_sb - 1), r, 0)),
                pl.BlockSpec((1, tr, kb),
                             lambda r, c, d: (jnp.clip(c - d, 0, n_sb - 1), r, 0)),
                pl.BlockSpec((kb, ts), lambda r, c, d: (0, d)),
                pl.BlockSpec((1, ts), lambda r, c, d: (0, c)),
            ],
            out_specs=pl.BlockSpec((tr, ts), lambda r, c, d: (r, c)),
            scratch_shapes=[pltpu.VMEM((tr, ts), jnp.float32)],
        ),
        compiler_params=pltpu.CompilerParams(
            dimension_semantics=("parallel", "parallel", "arbitrary"),
            vmem_limit_bytes=vmem_limit,
        ),
    )(x_hi, x_lo, scat, inv)
    return out[:rows, :sig_length]


def _ola_dense_matmul_path(x, rows, nframes, frame_shift, frame_size, sig_length,
                           dtype, budget, vmem_limit):
    # Fallback for frame_shift values whose lcm with 128 is too large for the
    # banded scheme (rare, non-power-of-two shifts).
    # TODO(synk): the dense fallback does not tile the K (frame) axis; very long
    # signals with such pathological shifts may exceed VMEM.
    itemsize = jnp.dtype(dtype).itemsize
    sub = max(_sublane_multiple(dtype), 16)
    rows_pad = _round_up(rows, sub)
    K = nframes * frame_size
    sig_pad = _round_up(sig_length, 128)

    ts = 128
    for cand in (512, 256, 128):
        if sig_pad % cand == 0:
            ts = cand
            break

    def step_bytes(tr_):
        return (2 * 2 * tr_ * K * 2 + 2 * K * ts * 2 + 2 * ts * 4
                + 2 * tr_ * ts * itemsize)

    tr = _round_up(min(rows_pad, 256), sub)
    while step_bytes(tr) > budget and tr > sub:
        tr = max(sub, _round_up(tr // 2, sub))
    rows_pad = _round_up(rows_pad, tr)

    xf = x.astype(jnp.float32).reshape(rows, K)
    if rows_pad != rows:
        xf = jnp.pad(xf, ((0, rows_pad - rows), (0, 0)))
    x_hi, x_lo = _split_bf16(xf)

    k_idx = jnp.arange(K, dtype=jnp.int32)
    col = (k_idx // frame_size) * frame_shift + (k_idx % frame_size)
    scat = jnp.zeros((K, sig_pad), dtype=jnp.bfloat16).at[k_idx, col].set(1)

    inv = _inverse_overlap_counts(sig_length, sig_pad, nframes, frame_shift,
                                  frame_size)

    out = pl.pallas_call(
        _ola_dense_matmul_kernel,
        out_shape=jax.ShapeDtypeStruct((rows_pad, sig_pad), dtype),
        grid_spec=pltpu.PrefetchScalarGridSpec(
            num_scalar_prefetch=0,
            grid=(rows_pad // tr, sig_pad // ts),
            in_specs=[
                pl.BlockSpec((tr, K), lambda r, c: (r, 0)),
                pl.BlockSpec((tr, K), lambda r, c: (r, 0)),
                pl.BlockSpec((K, ts), lambda r, c: (0, c)),
                pl.BlockSpec((1, ts), lambda r, c: (0, c)),
            ],
            out_specs=pl.BlockSpec((tr, ts), lambda r, c: (r, c)),
        ),
        compiler_params=pltpu.CompilerParams(
            dimension_semantics=("parallel", "parallel"),
            vmem_limit_bytes=vmem_limit,
        ),
    )(x_hi, x_lo, scat, inv)
    return out[:rows, :sig_length]


# ------------------------------------------------------------------ wrapper --
def torch_ola_pallas(inputs, frame_shift=256):
    """Overlap-and-add, semantics identical to TorchOLA.forward.

    (Zero-coverage positions — only possible when frame_shift > frame_size —
    return 0 instead of the reference's 0/0 = NaN.)
    """
    *lead, nframes, frame_size = inputs.shape
    frame_shift = int(frame_shift)
    nframes = int(nframes)
    frame_size = int(frame_size)
    sig_length = (nframes - 1) * frame_shift + frame_size
    dtype = inputs.dtype

    rows = 1
    for dim in lead:
        rows *= int(dim)
    x = inputs.reshape(rows, nframes, frame_size)

    budget, vmem_limit = _vmem_limits()

    aligned = (frame_shift % 128 == 0) and (frame_size % 128 == 0)
    if aligned:
        out = _ola_aligned_path(x, rows, nframes, frame_shift, frame_size,
                                sig_length, dtype, budget, vmem_limit)
    else:
        ts_mult = (128 * frame_shift) // math.gcd(128, frame_shift)
        if ts_mult <= 2048:
            out = _ola_banded_matmul_path(x, rows, nframes, frame_shift,
                                          frame_size, sig_length, dtype,
                                          budget, vmem_limit, ts_mult)
        else:
            out = _ola_dense_matmul_path(x, rows, nframes, frame_shift,
                                         frame_size, sig_length, dtype,
                                         budget, vmem_limit)
    return out.reshape(*lead, sig_length)


# ---------------------------------------------------------------- reference --
def torch_ola_ref(inputs, frame_shift):
    """Pure-JAX reference mirroring the PyTorch loop (f32 accumulation)."""
    nframes = inputs.shape[-2]
    frame_size = inputs.shape[-1]
    sig_length = (nframes - 1) * frame_shift + frame_size
    sig = jnp.zeros(inputs.shape[:-2] + (sig_length,), dtype=jnp.float32)
    ones = jnp.zeros_like(sig)
    for i in range(nframes):
        start = i * frame_shift
        sig = sig.at[..., start:start + frame_size].add(
            inputs[..., i, :].astype(jnp.float32))
        ones = ones.at[..., start:start + frame_size].add(1.0)
    return (sig / ones).astype(inputs.dtype)


if __name__ == "__main__":
    key = jax.random.PRNGKey(0)
    k1, k2, k3 = jax.random.split(key, 3)

    # 1) Unaligned small-frame config -> banded scatter-matmul path
    #    (several frame super-blocks, exercising the cross-tile spill axis).
    B, C, NF, FS, SHIFT = 2, 4, 80, 16, 4
    x = jax.random.normal(k1, (B, C, NF, FS), dtype=jnp.float32)
    out = jax.block_until_ready(torch_ola_pallas(x, frame_shift=SHIFT))
    ref = torch_ola_ref(x, SHIFT)
    assert out.shape == (B, C, (NF - 1) * SHIFT + FS), out.shape
    assert out.dtype == x.dtype
    assert jnp.allclose(out, ref, atol=1e-4, rtol=1e-4), float(
        jnp.max(jnp.abs(out - ref)))

    # 2) Lane-aligned config -> sliced (VPU) path with a tiled signal axis.
    B2, C2, NF2, FS2, SHIFT2 = 2, 2, 12, 256, 128
    y = jax.random.normal(k2, (B2, C2, NF2, FS2), dtype=jnp.float32)
    out2 = jax.block_until_ready(torch_ola_pallas(y, frame_shift=SHIFT2))
    ref2 = torch_ola_ref(y, SHIFT2)
    assert out2.shape == (B2, C2, (NF2 - 1) * SHIFT2 + FS2)
    assert jnp.allclose(out2, ref2, atol=1e-5, rtol=1e-5), float(
        jnp.max(jnp.abs(out2 - ref2)))

    # 3) Pathological frame_shift (huge lcm with 128) -> dense-scatter fallback.
    B3, C3, NF3, FS3, SHIFT3 = 2, 4, 6, 320, 300
    z = jax.random.normal(k3, (B3, C3, NF3, FS3), dtype=jnp.float32)
    out3 = jax.block_until_ready(torch_ola_pallas(z, frame_shift=SHIFT3))
    ref3 = torch_ola_ref(z, SHIFT3)
    assert out3.shape == (B3, C3, (NF3 - 1) * SHIFT3 + FS3)
    assert jnp.allclose(out3, ref3, atol=1e-4, rtol=1e-4), float(
        jnp.max(jnp.abs(out3 - ref3)))

    print("KERNEL_OK")
</pallas_src>

<mosaic_0001>
module attributes {stable_mosaic.version = 11 : i64} {
  func.func @_ola_banded_matmul_kernel(%arg0: i32, %arg1: i32, %arg2: i32, %arg3: memref<1x16x1024xbf16, #tpu.memory_space<vmem>>, %arg4: memref<1x16x1024xbf16, #tpu.memory_space<vmem>>, %arg5: memref<1024x256xbf16, #tpu.memory_space<vmem>>, %arg6: memref<1x256xf32, #tpu.memory_space<vmem>>, %arg7: memref<16x256xf32, #tpu.memory_space<vmem>>, %arg8: memref<16x256xf32, #tpu.memory_space<vmem>>) attributes {dimension_semantics = [#tpu.dimension_semantics<parallel>, #tpu.dimension_semantics<parallel>, #tpu.dimension_semantics<arbitrary>], iteration_bounds = array<i64: 1, 3, 2>, scalar_prefetch = 0 : i64, scratch_operands = 1 : i64, tpu.core_type = #tpu.core_type<tc>, window_params = [{transform_indices = @transform_0, window_bounds = array<i64: 1, 16, 1024>}, {transform_indices = @transform_1, window_bounds = array<i64: 1, 16, 1024>}, {transform_indices = @transform_2, window_bounds = array<i64: 1024, 256>}, {transform_indices = @transform_3, window_bounds = array<i64: 1, 256>}, {transform_indices = @transform_4, window_bounds = array<i64: 16, 256>}]} {
    %c0_i32 = arith.constant 0 : i32
    %0 = arith.cmpi eq, %arg2, %c0_i32 : i32
    %1 = arith.extui %0 : i1 to i32
    %c0_i32_0 = arith.constant 0 : i32
    %2 = arith.cmpi ne, %1, %c0_i32_0 : i32
    scf.if %2 {
      %cst = arith.constant 0.000000e+00 : f32
      %12 = vector.broadcast %cst : f32 to vector<16x256xf32>
      %c0 = arith.constant 0 : index
      %c0_4 = arith.constant 0 : index
      %13 = vector.load %arg8[%c0, %c0_4] : memref<16x256xf32, #tpu.memory_space<vmem>>, vector<16x256xf32>
      tpu.vector_store %arg8[%c0, %c0_4], %12 {strides = array<i32>} : memref<16x256xf32, #tpu.memory_space<vmem>>, vector<16x256xf32>,
    } else {
    }
    %3 = arith.subi %arg1, %arg2 : i32
    %c0_i32_1 = arith.constant 0 : i32
    %4 = arith.cmpi sge, %3, %c0_i32_1 : i32
    %c2_i32 = arith.constant 2 : i32
    %5 = arith.cmpi slt, %3, %c2_i32 : i32
    %6 = arith.andi %4, %5 : i1
    %7 = arith.extui %6 : i1 to i32
    %c0_i32_2 = arith.constant 0 : i32
    %8 = arith.cmpi ne, %7, %c0_i32_2 : i32
    scf.if %8 {
      %c0 = arith.constant 0 : index
      %c0_4 = arith.constant 0 : index
      %12 = vector.load %arg5[%c0, %c0_4] : memref<1024x256xbf16, #tpu.memory_space<vmem>>, vector<1024x256xbf16>
      %c0_5 = arith.constant 0 : index
      %c0_6 = arith.constant 0 : index
      %13 = vector.load %arg8[%c0_5, %c0_6] : memref<16x256xf32, #tpu.memory_space<vmem>>, vector<16x256xf32>
      %c0_7 = arith.constant 0 : index
      %c0_8 = arith.constant 0 : index
      %c0_9 = arith.constant 0 : index
      %14 = vector.load %arg3[%c0_7, %c0_8, %c0_9] : memref<1x16x1024xbf16, #tpu.memory_space<vmem>>, vector<1x16x1024xbf16>
      %15 = vector.shape_cast %14 : vector<1x16x1024xbf16> to vector<16x1024xbf16>
      %cst = arith.constant dense<0.000000e+00> : vector<16x256xf32>
      %16 = tpu.matmul %15, %12, %cst {dimension_numbers = #tpu.dot_dimension_numbers<[1], [0], [0], [1], [0, 0, 1, 1], [], []>} : vector<16x1024xbf16>, vector<1024x256xbf16>, vector<16x256xf32> -> vector<16x256xf32>
      %c0_10 = arith.constant 0 : index
      %c0_11 = arith.constant 0 : index
      %c0_12 = arith.constant 0 : index
      %17 = vector.load %arg4[%c0_10, %c0_11, %c0_12] : memref<1x16x1024xbf16, #tpu.memory_space<vmem>>, vector<1x16x1024xbf16>
      %18 = vector.shape_cast %17 : vector<1x16x1024xbf16> to vector<16x1024xbf16>
      %cst_13 = arith.constant dense<0.000000e+00> : vector<16x256xf32>
      %19 = tpu.matmul %18, %12, %cst_13 {dimension_numbers = #tpu.dot_dimension_numbers<[1], [0], [0], [1], [0, 0, 1, 1], [], []>} : vector<16x1024xbf16>, vector<1024x256xbf16>, vector<16x256xf32> -> vector<16x256xf32>
      %20 = arith.addf %16, %19 : vector<16x256xf32>
      %21 = arith.addf %13, %20 : vector<16x256xf32>
      %c0_14 = arith.constant 0 : index
      %c0_15 = arith.constant 0 : index
      %22 = vector.load %arg8[%c0_14, %c0_15] : memref<16x256xf32, #tpu.memory_space<vmem>>, vector<16x256xf32>
      tpu.vector_store %arg8[%c0_14, %c0_15], %21 {strides = array<i32>} : memref<16x256xf32, #tpu.memory_space<vmem>>, vector<16x256xf32>,
    } else {
    }
    %c1_i32 = arith.constant 1 : i32
    %9 = arith.cmpi eq, %arg2, %c1_i32 : i32
    %10 = arith.extui %9 : i1 to i32
    %c0_i32_3 = arith.constant 0 : i32
    %11 = arith.cmpi ne, %10, %c0_i32_3 : i32
    scf.if %11 {
      %c0 = arith.constant 0 : index
      %c0_4 = arith.constant 0 : index
      %12 = vector.load %arg8[%c0, %c0_4] : memref<16x256xf32, #tpu.memory_space<vmem>>, vector<16x256xf32>
      %c0_5 = arith.constant 0 : index
      %c0_6 = arith.constant 0 : index
      %13 = vector.load %arg6[%c0_5, %c0_6] : memref<1x256xf32, #tpu.memory_space<vmem>>, vector<1x256xf32>
      %14 = vector.broadcast %13 : vector<1x256xf32> to vector<16x256xf32>
      %15 = arith.mulf %12, %14 : vector<16x256xf32>
      %c0_7 = arith.constant 0 : index
      %c0_8 = arith.constant 0 : index
      %16 = vector.load %arg7[%c0_7, %c0_8] : memref<16x256xf32, #tpu.memory_space<vmem>>, vector<16x256xf32>
      tpu.vector_store %arg7[%c0_7, %c0_8], %15 {strides = array<i32>} : memref<16x256xf32, #tpu.memory_space<vmem>>, vector<16x256xf32>,
    } else {
    }
    return
  }
  func.func @transform_0(%arg0: i32, %arg1: i32, %arg2: i32) -> (i32, i32, i32) {
    %0 = arith.subi %arg1, %arg2 : i32
    %c0_i32 = arith.constant 0 : i32
    %c1_i32 = arith.constant 1 : i32
    %1 = arith.maxsi %c0_i32, %0 : i32
    %2 = arith.minsi %c1_i32, %1 : i32
    %c0_i32_0 = arith.constant 0 : i32
    %c0_i32_1 = arith.constant 0 : i32
    return %2, %arg0, %c0_i32_0 : i32, i32, i32
  }
  func.func @transform_1(%arg0: i32, %arg1: i32, %arg2: i32) -> (i32, i32, i32) {
    %0 = arith.subi %arg1, %arg2 : i32
    %c0_i32 = arith.constant 0 : i32
    %c1_i32 = arith.constant 1 : i32
    %1 = arith.maxsi %c0_i32, %0 : i32
    %2 = arith.minsi %c1_i32, %1 : i32
    %c0_i32_0 = arith.constant 0 : i32
    %c0_i32_1 = arith.constant 0 : i32
    return %2, %arg0, %c0_i32_0 : i32, i32, i32
  }
  func.func @transform_2(%arg0: i32, %arg1: i32, %arg2: i32) -> (i32, i32) {
    %c0_i32 = arith.constant 0 : i32
    %c0_i32_0 = arith.constant 0 : i32
    return %c0_i32, %arg2 : i32, i32
  }
  func.func @transform_3(%arg0: i32, %arg1: i32, %arg2: i32) -> (i32, i32) {
    %c0_i32 = arith.constant 0 : i32
    %c0_i32_0 = arith.constant 0 : i32
    return %c0_i32, %arg1 : i32, i32
  }
  func.func @transform_4(%arg0: i32, %arg1: i32, %arg2: i32) -> (i32, i32) {
    %c0_i32 = arith.constant 0 : i32
    return %arg0, %arg1 : i32, i32
  }
}

</mosaic_0001>

<llo_original>
// kernel: tpu_custom_call.1
$region0: #{tpu_custom_call.1}
  #allocation0 [shape = 'u32[]', space=smem, size = 0x4, offset = 0x4, fixed_abs, tag = 'smem constant byte address 0x4 - core index']
  #allocation1 [shape = 'u32[144,128]{1,0:T(1,128)}', space=vmem, size = 0x12000, scoped, tag = 'internal scratch']
  #allocation2 [shape = 'f32[16,256]{1,0:T(8,128)}', space=vmem, size = 0x4000, scoped, tag = 'scratch operand']
  %s0 = inlined_call_operand.hbm [shape: bf16[2,16,1024], index: 0, kind: input, shape index: {}]
  %s1 = inlined_call_operand.hbm [shape: bf16[2,16,1024], index: 1, kind: input, shape index: {}]
  %s2 = inlined_call_operand.hbm [shape: bf16[1024,512], index: 2, kind: input, shape index: {}]
  %s3 = inlined_call_operand.vmem [shape: f32[1,768], index: 3, kind: input, shape index: {}]
  %s4 = inlined_call_operand.hbm [shape: f32[16,768], index: 4, kind: output, shape index: {}]
  %s5 = sld [smem:[#allocation0]]
  $region73: #{tpu_custom_call.1} parent=0
    _
  %s7 = ssub.s32 1, %s5
  %s8 = scalar_select 0, %s7, %s5
  $region1: #{tpu_custom_call.1} parent=0
    #allocation3 [shape = 'u8[65536]{0}', space=vmem, size = 0x10000, scoped, tag = 'input window, operand 0']
    #allocation4 [shape = 's32[2]{0}', space=sflag, size = 0x8, scoped, tag = 'scoped memory for tpu_custom_call.1']
    #allocation5 [shape = 's32[2]{0}', space=sflag, size = 0x8, scoped, tag = 'scoped memory for tpu_custom_call.1']
    #allocation6 [shape = 'u8[65536]{0}', space=vmem, size = 0x10000, scoped, tag = 'input window, operand 1']
    #allocation7 [shape = 's32[2]{0}', space=sflag, size = 0x8, scoped, tag = 'scoped memory for tpu_custom_call.1']
    #allocation8 [shape = 'u8[1048576]{0}', space=vmem, size = 0x100000, scoped, tag = 'input window, operand 2']
    #allocation9 [shape = 'u8[32768]{0}', space=vmem, size = 0x8000, scoped, tag = 'output window, operand 0']
    %9 = vsyncpa [#allocation4], 0
    %s10 = scalar_lea.sflag [#allocation4], 1
    %11 = vsyncpa %s10, 0
    %12 = vsyncpa [#allocation7], 0
    %s13 = scalar_lea.sflag [#allocation7], 1
    %14 = vsyncpa %s13, 0
    %15 = vsyncpa [#allocation5], 0
    %s16 = scalar_lea.sflag [#allocation5], 1
    %17 = vsyncpa %s16, 0
    loop: start=0, step=1, limit=8
    $region2: #{tpu_custom_call.1} parent=1 // loop_pre_header
      _
    $region3: #{tpu_custom_call.1} parent=1 // loop_header
      %s19 = sphi 0, %s23
      %p20 = scmp.ge.s32.totalorder %s19, 8
      %s26 = sphi 0, %s45
      %s27 = sphi 0, %s41
      %s28 = sphi 0, %s37
      %s29 = sphi 0, %s26
      %s30 = sphi 0, %s27
      %s31 = sphi 0, %s28
      %s32 = sphi 0, %s29
      %s33 = sphi 0, %s30
      %s34 = sphi 0, %s31
      %s60 = sphi 0, %s62
      %s63 = sphi 0, %s60
      %s64 = sphi 0, %s63
      %s80 = sphi 0, %s64
      %s98 = sphi 0, %s100
      %s101 = sphi 0, %s98
      %s102 = sphi 0, %s101
      %s118 = sphi 0, %s102
      %s124 = sphi 0, %s126
      %s127 = sphi 0, %s124
      %s128 = sphi 0, %s127
      %s144 = sphi 0, %s128
      %s150 = sphi 0, %s152
      %s153 = sphi 0, %s150
      %s154 = sphi 0, %s153
      %s170 = sphi 0, %s154
      %s178 = sphi 0, %s180
      %s181 = sphi 0, %s178
      %s182 = sphi 0, %s181
      %s198 = sphi 0, %s182
    $region4: #{tpu_custom_call.1} parent=1 // loop_header_branch
      %22 = sbr.rel (%p20) target = $region8
    $region5: #{tpu_custom_call.1} parent=1 // loop_body
      %s24 = ssub.s32 %s19, 1
      %s25 = ssub.s32 %s19, 2
      %s35 = sadd.s32 1, %s28
      %p36 = scmp.ge.s32.totalorder %s35, 2
      %s37 = scalar_select %p36, 0, %s35
      %s38 = sadd.s32 1, %s27
      %s39 = scalar_select %p36, %s38, %s27
      %p40 = scmp.ge.s32.totalorder %s39, 3
      %s41 = scalar_select %p40, 0, %s39
      %s42 = sadd.s32 1, %s26
      %s43 = scalar_select %p40, %s42, %s26
      %p44 = scmp.ge.s32.totalorder %s43, 1
      %s45 = scalar_select %p44, 0, %s43
      %s46 = ssub.s32 %s27, %s28
      %p47 = scmp.gt.s32.totalorder %s46, 0
      %s48 = scalar_select %p47, %s46, 0
      %p49 = scmp.lt.s32.totalorder %s48, 1
      %s50 = scalar_select %p49, %s48, 1
      %s51 = ssub.s32 %s41, %s37
      %p52 = scmp.gt.s32.totalorder %s51, 0
      %s53 = scalar_select %p52, %s51, 0
      %p54 = scmp.lt.s32.totalorder %s53, 1
      %s55 = scalar_select %p54, %s53, 1
      %s56 = ssub.s32 %s50, %s55
      %s57 = ssub.s32 %s26, %s45
      %s58 = sor.u32 %s56, %s57
      %p59 = scmp.eq.s32.totalorder %s58, 0
      %s61 = sadd.s32 %s60, 1
      %s62 = scalar_select %p59, %s60, %s61
      %p65 = pneg %p59
      %p66 = scmp.eq.s32.totalorder %s19, 5
      %p67 = por %p65, %p66
      %p68 = scmp.ne.s32.totalorder %s60, %s63
      %p69 = scmp.eq.s32.totalorder %s19, 0
      %p70 = por %p68, %p69
      %p71 = scmp.ne.s32.totalorder %s60, %s63
      %p72 = scmp.eq.s32.totalorder %s24, 5
      %p73 = por %p71, %p72
      %p74 = scmp.ne.s32.totalorder %s63, %s64
      %p75 = scmp.eq.s32.totalorder %s24, 0
      %p76 = por %p74, %p75
      %p77 = scmp.ne.s32.totalorder %s63, %s64
      %p78 = scmp.eq.s32.totalorder %s25, 5
      %p79 = por %p77, %p78
      %p81 = scmp.ne.s32.totalorder %s64, %s80
      %p82 = scmp.eq.s32.totalorder %s25, 0
      %p83 = por %p81, %p82
      %s84 = ssub.s32 %s27, %s28
      %p85 = scmp.gt.s32.totalorder %s84, 0
      %s86 = scalar_select %p85, %s84, 0
      %p87 = scmp.lt.s32.totalorder %s86, 1
      %s88 = scalar_select %p87, %s86, 1
      %s89 = ssub.s32 %s41, %s37
      %p90 = scmp.gt.s32.totalorder %s89, 0
      %s91 = scalar_select %p90, %s89, 0
      %p92 = scmp.lt.s32.totalorder %s91, 1
      %s93 = scalar_select %p92, %s91, 1
      %s94 = ssub.s32 %s88, %s93
      %s95 = ssub.s32 %s26, %s45
      %s96 = sor.u32 %s94, %s95
      %p97 = scmp.eq.s32.totalorder %s96, 0
      %s99 = sadd.s32 %s98, 1
      %s100 = scalar_select %p97, %s98, %s99
      %p103 = pneg %p97
      %p104 = scmp.eq.s32.totalorder %s19, 5
      %p105 = por %p103, %p104
      %p106 = scmp.ne.s32.totalorder %s98, %s101
      %p107 = scmp.eq.s32.totalorder %s19, 0
      %p108 = por %p106, %p107
      %p109 = scmp.ne.s32.totalorder %s98, %s101
      %p110 = scmp.eq.s32.totalorder %s24, 5
      %p111 = por %p109, %p110
      %p112 = scmp.ne.s32.totalorder %s101, %s102
      %p113 = scmp.eq.s32.totalorder %s24, 0
      %p114 = por %p112, %p113
      %p115 = scmp.ne.s32.totalorder %s101, %s102
      %p116 = scmp.eq.s32.totalorder %s25, 5
      %p117 = por %p115, %p116
      %p119 = scmp.ne.s32.totalorder %s102, %s118
      %p120 = scmp.eq.s32.totalorder %s25, 0
      %p121 = por %p119, %p120
      %s122 = ssub.s32 %s28, %s37
      %p123 = scmp.eq.s32.totalorder %s122, 0
      %s125 = sadd.s32 %s124, 1
      %s126 = scalar_select %p123, %s124, %s125
      %p129 = pneg %p123
      %p130 = scmp.eq.s32.totalorder %s19, 5
      %p131 = por %p129, %p130
      %p132 = scmp.ne.s32.totalorder %s124, %s127
      %p133 = scmp.eq.s32.totalorder %s19, 0
      %p134 = por %p132, %p133
      %p135 = scmp.ne.s32.totalorder %s124, %s127
      %p136 = scmp.eq.s32.totalorder %s24, 5
      %p137 = por %p135, %p136
      %p138 = scmp.ne.s32.totalorder %s127, %s128
      %p139 = scmp.eq.s32.totalorder %s24, 0
      %p140 = por %p138, %p139
      %p141 = scmp.ne.s32.totalorder %s127, %s128
      %p142 = scmp.eq.s32.totalorder %s25, 5
      %p143 = por %p141, %p142
      %p145 = scmp.ne.s32.totalorder %s128, %s144
      %p146 = scmp.eq.s32.totalorder %s25, 0
      %p147 = por %p145, %p146
      %s148 = ssub.s32 %s27, %s41
      %p149 = scmp.eq.s32.totalorder %s148, 0
      %s151 = sadd.s32 %s150, 1
      %s152 = scalar_select %p149, %s150, %s151
      %p155 = pneg %p149
      %p156 = scmp.eq.s32.totalorder %s19, 5
      %p157 = por %p155, %p156
      %p158 = scmp.ne.s32.totalorder %s150, %s153
      %p159 = scmp.eq.s32.totalorder %s19, 0
      %p160 = por %p158, %p159
      %p161 = scmp.ne.s32.totalorder %s150, %s153
      %p162 = scmp.eq.s32.totalorder %s24, 5
      %p163 = por %p161, %p162
      %p164 = scmp.ne.s32.totalorder %s153, %s154
      %p165 = scmp.eq.s32.totalorder %s24, 0
      %p166 = por %p164, %p165
      %p167 = scmp.ne.s32.totalorder %s153, %s154
      %p168 = scmp.eq.s32.totalorder %s25, 5
      %p169 = por %p167, %p168
      %p171 = scmp.ne.s32.totalorder %s154, %s170
      %p172 = scmp.eq.s32.totalorder %s25, 0
      %p173 = por %p171, %p172
      %s174 = ssub.s32 %s26, %s45
      %s175 = ssub.s32 %s27, %s41
      %s176 = sor.u32 %s174, %s175
      %p177 = scmp.eq.s32.totalorder %s176, 0
      %s179 = sadd.s32 %s178, 1
      %s180 = scalar_select %p177, %s178, %s179
      %p183 = pneg %p177
      %p184 = scmp.eq.s32.totalorder %s19, 5
      %p185 = por %p183, %p184
      %p186 = scmp.ne.s32.totalorder %s178, %s181
      %p187 = scmp.eq.s32.totalorder %s19, 0
      %p188 = por %p186, %p187
      %p189 = scmp.ne.s32.totalorder %s178, %s181
      %p190 = scmp.eq.s32.totalorder %s24, 5
      %p191 = por %p189, %p190
      %p192 = scmp.ne.s32.totalorder %s181, %s182
      %p193 = scmp.eq.s32.totalorder %s24, 0
      %p194 = por %p192, %p193
      %p195 = scmp.ne.s32.totalorder %s181, %s182
      %p196 = scmp.eq.s32.totalorder %s25, 5
      %p197 = por %p195, %p196
      %p199 = scmp.ne.s32.totalorder %s182, %s198
      %p200 = scmp.eq.s32.totalorder %s25, 0
      %p201 = por %p199, %p200
      %p202 = scmp.le.s32.totalorder 1, %s19
      %p203 = scmp.lt.s32.totalorder %s19, 7
      %p204 = pnand %p202, %p203
      %p205 = pneg %p204
      // Predicated region
      $region9: #{tpu_custom_call.1} parent=5 // pred_check
        _
      $region10: #{tpu_custom_call.1} parent=5 // pred_check_branch
        %207 = sbr.rel (%p204) target = $region12
      $region11: #{tpu_custom_call.1} parent=5 // pred_region
        %s208 = ssub.s32 %s19, 1
      $region12: #{tpu_custom_call.1} parent=5 // pred_fallthru
        _
      %p209 = scmp.lt.s32.totalorder %s19, 6
      // Predicated region
      $region13: #{tpu_custom_call.1} parent=5 // pred_check
        %p210 = pneg %p209
      $region14: #{tpu_custom_call.1} parent=5 // pred_check_branch
        %212 = sbr.rel (%p210) target = $region16
      $region15: #{tpu_custom_call.1} parent=5 // pred_region
        // Predicated region
        $region17: #{tpu_custom_call.1} parent=15 // pred_check
          %p213 = pneg %p70
        $region18: #{tpu_custom_call.1} parent=15 // pred_check_branch
          %215 = sbr.rel (%p213) target = $region20
        $region19: #{tpu_custom_call.1} parent=15 // pred_region
          %s216 = sand.u32 %s60, 1
          %s217 = scalar_lea.sflag [#allocation4], %s216
          %s218 = sand.u32 %s60, 1
          %s219 = smul.addr %s218, 64
          %s220 = scalar_lea.vmem [#allocation3], %s219
          %s221 = ssub.s32 %s27, %s28
          %p222 = scmp.gt.s32.totalorder %s221, 0
          %s223 = scalar_select %p222, %s221, 0
          %p224 = scmp.lt.s32.totalorder %s223, 1
          %s225 = scalar_select %p224, %s223, 1
          %s226 = smul.u32 2, %s26
          %s228 = ssub.s32 1024, 1024
          %229 = vsyncadd %s217, %s228
          %s230 = smul.addr %s226, 8
          %s231 = smul.addr %s225, 16
          %s232 = sadd.s32 %s230, %s231
          %s233 = smul.addr %s232, 64
          %s234 = scalar_lea.hbm %s0, %s233
          %s235 = sshll.u32 %s220, 4
          %s236 = int_to_ptr.vmem [resolvable:$true] %s235
          %241 = dma.hbm_to_vmem [thread:$0]  %s234, 1024, %s236, %s217, 512, 512, 32
        $region20: #{tpu_custom_call.1} parent=15 // pred_fallthru
          _
        // Predicated region
        $region21: #{tpu_custom_call.1} parent=15 // pred_check
          %p242 = pneg %p108
        $region22: #{tpu_custom_call.1} parent=15 // pred_check_branch
          %244 = sbr.rel (%p242) target = $region24
        $region23: #{tpu_custom_call.1} parent=15 // pred_region
          %s245 = sand.u32 %s19, 1
          %s246 = scalar_lea.sflag [#allocation7], %s245
          %s247 = sand.u32 %s98, 1
          %s248 = smul.addr %s247, 64
          %s249 = scalar_lea.vmem [#allocation6], %s248
          %s250 = ssub.s32 %s27, %s28
          %p251 = scmp.gt.s32.totalorder %s250, 0
          %s252 = scalar_select %p251, %s250, 0
          %p253 = scmp.lt.s32.totalorder %s252, 1
          %s254 = scalar_select %p253, %s252, 1
          %s255 = smul.u32 2, %s26
          %s257 = ssub.s32 1024, 1024
          %258 = vsyncadd %s246, %s257
          %s259 = smul.addr %s255, 8
          %s260 = smul.addr %s254, 16
          %s261 = sadd.s32 %s259, %s260
          %s262 = smul.addr %s261, 64
          %s263 = scalar_lea.hbm %s1, %s262
          %s264 = sshll.u32 %s249, 4
          %s265 = int_to_ptr.vmem [resolvable:$true] %s264
          %270 = dma.hbm_to_vmem [thread:$0]  %s263, 1024, %s265, %s246, 512, 512, 32
        $region24: #{tpu_custom_call.1} parent=15 // pred_fallthru
          _
        // Predicated region
        $region25: #{tpu_custom_call.1} parent=15 // pred_check
          %p271 = pneg %p134
        $region26: #{tpu_custom_call.1} parent=15 // pred_check_branch
          %273 = sbr.rel (%p271) target = $region28
        $region27: #{tpu_custom_call.1} parent=15 // pred_region
          %s274 = sand.u32 %s19, 1
          %s275 = scalar_lea.sflag [#allocation7], %s274
          %s276 = sand.u32 %s124, 1
          %s277 = smul.addr %s276, 1024
          %s278 = scalar_lea.vmem [#allocation8], %s277
          %s279 = smul.u32 2, %s28
          %s281 = ssub.s32 16384, 16384
          %282 = vsyncadd %s275, %s281
          %s283 = smul.addr %s279, 64
          %s284 = scalar_lea.hbm %s2, %s283
          %s285 = sshll.u32 %s278, 4
          %s286 = int_to_ptr.vmem [resolvable:$true] %s285
          %291 = dma.hbm_to_vmem [thread:$0]  %s284, 16384, %s286, %s275, 256, 128, 8
        $region28: #{tpu_custom_call.1} parent=15 // pred_fallthru
          _
        // Predicated region
        $region29: #{tpu_custom_call.1} parent=15 // pred_check
          %p292 = pneg %p160
        $region30: #{tpu_custom_call.1} parent=15 // pred_check_branch
          %294 = sbr.rel (%p292) target = $region32
        $region31: #{tpu_custom_call.1} parent=15 // pred_region
          %s295 = smul.u32 2, %s27
          %p296 = scmp.lt.s32.totalorder %s295, 5
          %s297 = scalar_select %p296, %s295, 5
          %s298 = scalar_lea.vmem %s3, %s297
          %s299 = smul.u32 2, %s27
        $region32: #{tpu_custom_call.1} parent=15 // pred_fallthru
          _
      $region16: #{tpu_custom_call.1} parent=5 // pred_fallthru
        _
      %p300 = scmp.le.s32.totalorder 1, %s19
      %p301 = scmp.lt.s32.totalorder %s19, 7
      %p302 = pnand %p300, %p301
      %p303 = pneg %p302
      // Predicated region
      $region33: #{tpu_custom_call.1} parent=5 // pred_check
        _
      $region34: #{tpu_custom_call.1} parent=5 // pred_check_branch
        %305 = sbr.rel (%p302) target = $region36
      $region35: #{tpu_custom_call.1} parent=5 // pred_region
        %s306 = ssub.s32 %s19, 1
        %s307 = sand.u32 %s63, 1
        %s308 = scalar_lea.sflag [#allocation4], %s307
        %s309 = sand.u32 %s63, 1
        %s310 = smul.addr %s309, 64
        %s311 = scalar_lea.vmem [#allocation3], %s310
        // Predicated region
        $region37: #{tpu_custom_call.1} parent=35 // pred_check
          %p312 = pneg %p76
        $region38: #{tpu_custom_call.1} parent=35 // pred_check_branch
          %314 = sbr.rel (%p312) target = $region40
        $region39: #{tpu_custom_call.1} parent=35 // pred_region
          %315 = dma.done %s308, 1024
        $region40: #{tpu_custom_call.1} parent=35 // pred_fallthru
          _
        %s316 = sand.u32 %s24, 1
        %s317 = scalar_lea.sflag [#allocation7], %s316
        %s318 = sand.u32 %s101, 1
        %s319 = smul.addr %s318, 64
        %s320 = scalar_lea.vmem [#allocation6], %s319
        // Predicated region
        $region41: #{tpu_custom_call.1} parent=35 // pred_check
          %p321 = pneg %p114
        $region42: #{tpu_custom_call.1} parent=35 // pred_check_branch
          %323 = sbr.rel (%p321) target = $region44
        $region43: #{tpu_custom_call.1} parent=35 // pred_region
          %324 = dma.done %s317, 1024
        $region44: #{tpu_custom_call.1} parent=35 // pred_fallthru
          _
        %s325 = sand.u32 %s24, 1
        %s326 = scalar_lea.sflag [#allocation7], %s325
        %s327 = sand.u32 %s127, 1
        %s328 = smul.addr %s327, 1024
        %s329 = scalar_lea.vmem [#allocation8], %s328
        // Predicated region
        $region45: #{tpu_custom_call.1} parent=35 // pred_check
          %p330 = pneg %p140
        $region46: #{tpu_custom_call.1} parent=35 // pred_check_branch
          %332 = sbr.rel (%p330) target = $region48
        $region47: #{tpu_custom_call.1} parent=35 // pred_region
          %333 = dma.done %s326, 16384
        $region48: #{tpu_custom_call.1} parent=35 // pred_fallthru
          _
        %s334 = sand.u32 %s63, 1
        %s335 = scalar_lea.sflag [#allocation4], %s334
        %s336 = sand.u32 %s63, 1
        %s337 = smul.addr %s336, 64
        %s338 = scalar_lea.vmem [#allocation3], %s337
        %p339 = pneg %p76
        %p340 = pneg %p73
        %s341 = sand.u32 %s24, 1
        %s342 = scalar_lea.sflag [#allocation7], %s341
        %s343 = sand.u32 %s101, 1
        %s344 = smul.addr %s343, 64
        %s345 = scalar_lea.vmem [#allocation6], %s344
        %p346 = pneg %p114
        %p347 = pneg %p111
        %s348 = sand.u32 %s24, 1
        %s349 = scalar_lea.sflag [#allocation7], %s348
        %s350 = sand.u32 %s127, 1
        %s351 = smul.addr %s350, 1024
        %s352 = scalar_lea.vmem [#allocation8], %s351
        %p353 = pneg %p140
        %p354 = pneg %p137
        %s355 = smul.u32 2, %s30
        %p356 = scmp.lt.s32.totalorder %s355, 5
        %s357 = scalar_select %p356, %s355, 5
        %s358 = scalar_lea.vmem %s3, %s357
        %p359 = pneg %p166
        %p360 = pneg %p163
        %p361 = pneg %p194
        %p362 = pneg %p191
        %s363 = sand.u32 %s181, 1
        %s364 = scalar_lea.sflag [#allocation5], %s363
        %s365 = sand.u32 %s181, 1
        %s366 = smul.addr %s365, 32
        %s367 = scalar_lea.vmem [#allocation9], %s366
        %s368 = ssub.s32 %s30, %s31
        %p369 = scmp.gt.s32.totalorder %s368, 0
        %s370 = scalar_select %p369, %s368, 0
        %p371 = scmp.lt.s32.totalorder %s370, 1
        %s372 = scalar_select %p371, %s370, 1
        %s373 = smul.u32 2, %s29
        %s374 = ssub.s32 %s30, %s31
        %p375 = scmp.gt.s32.totalorder %s374, 0
        %s376 = scalar_select %p375, %s374, 0
        %p377 = scmp.lt.s32.totalorder %s376, 1
        %s378 = scalar_select %p377, %s376, 1
        %s379 = smul.u32 2, %s29
        %s380 = smul.u32 2, %s31
        %s381 = smul.u32 2, %s30
        %p382 = scmp.lt.s32.totalorder %s381, 5
        %s383 = scalar_select %p382, %s381, 5
        %s384 = scalar_lea.vmem %s3, %s383
        %s385 = smul.u32 2, %s30
        %s386 = smul.u32 2, %s29
        %s387 = smul.u32 2, %s30
        %p388 = scmp.eq.s32.totalorder %s31, 0
        // Predicated region
        $region49: #{tpu_custom_call.1} parent=35 // pred_check
          %p389 = pneg %p388
        $region50: #{tpu_custom_call.1} parent=35 // pred_check_branch
          %391 = sbr.rel (%p389) target = $region52
        $region51: #{tpu_custom_call.1} parent=35 // pred_region
          %392 = vst [vmem:[#allocation2] sm:$0xff] 0.0
          %393 = vst [vmem:[#allocation2 + $0x8] sm:$0xff] 0.0
          %394 = vst [vmem:[#allocation2 + $0x10] sm:$0xff] 0.0
          %395 = vst [vmem:[#allocation2 + $0x18] sm:$0xff] 0.0
        $region52: #{tpu_custom_call.1} parent=35 // pred_fallthru
          _
        %s396 = ssub.s32 %s30, %s31
        %p397 = scmp.ge.s32.totalorder %s396, 0
        %p398 = scmp.lt.s32.totalorder %s396, 2
        %p399 = pnand %p397, %p398
        %p400 = pneg %p399
        // Predicated region
        $region53: #{tpu_custom_call.1} parent=35 // pred_check
          _
        $region54: #{tpu_custom_call.1} parent=35 // pred_check_branch
          %402 = sbr.rel (%p399) target = $region56
        $region55: #{tpu_custom_call.1} parent=35 // pred_region
          %v403 = vld [vmem:[%s329] sm:$0xff]
          %v404 = vld [vmem:[%s329 + $0x8] sm:$0xff]
          %v405 = vld [vmem:[%s329 + $0x10] sm:$0xff]
          %v406 = vld [vmem:[%s329 + $0x18] sm:$0xff]
          %v407 = vld [vmem:[%s329 + $0x20] sm:$0xff]
          %v408 = vld [vmem:[%s329 + $0x28] sm:$0xff]
          %v409 = vld [vmem:[%s329 + $0x30] sm:$0xff]
          %v410 = vld [vmem:[%s329 + $0x38] sm:$0xff]
          %v411 = vld [vmem:[%s329 + $0x40] sm:$0xff]
          %v412 = vld [vmem:[%s329 + $0x48] sm:$0xff]
          %v413 = vld [vmem:[%s329 + $0x50] sm:$0xff]
          %v414 = vld [vmem:[%s329 + $0x58] sm:$0xff]
          %v415 = vld [vmem:[%s329 + $0x60] sm:$0xff]
          %v416 = vld [vmem:[%s329 + $0x68] sm:$0xff]
          %v417 = vld [vmem:[%s329 + $0x70] sm:$0xff]
          %v418 = vld [vmem:[%s329 + $0x78] sm:$0xff]
          %v419 = vld [vmem:[%s329 + $0x80] sm:$0xff]
          %v420 = vld [vmem:[%s329 + $0x88] sm:$0xff]
          %v421 = vld [vmem:[%s329 + $0x90] sm:$0xff]
          %v422 = vld [vmem:[%s329 + $0x98] sm:$0xff]
          %v423 = vld [vmem:[%s329 + $0xa0] sm:$0xff]
          %v424 = vld [vmem:[%s329 + $0xa8] sm:$0xff]
          %v425 = vld [vmem:[%s329 + $0xb0] sm:$0xff]
          %v426 = vld [vmem:[%s329 + $0xb8] sm:$0xff]
          %v427 = vld [vmem:[%s329 + $0xc0] sm:$0xff]
          %v428 = vld [vmem:[%s329 + $0xc8] sm:$0xff]
          %v429 = vld [vmem:[%s329 + $0xd0] sm:$0xff]
          %v430 = vld [vmem:[%s329 + $0xd8] sm:$0xff]
          %v431 = vld [vmem:[%s329 + $0xe0] sm:$0xff]
          %v432 = vld [vmem:[%s329 + $0xe8] sm:$0xff]
          %v433 = vld [vmem:[%s329 + $0xf0] sm:$0xff]
          %v434 = vld [vmem:[%s329 + $0xf8] sm:$0xff]
          %v435 = vld [vmem:[%s329 + $0x100] sm:$0xff]
          %v436 = vld [vmem:[%s329 + $0x108] sm:$0xff]
          %v437 = vld [vmem:[%s329 + $0x110] sm:$0xff]
          %v438 = vld [vmem:[%s329 + $0x118] sm:$0xff]
          %v439 = vld [vmem:[%s329 + $0x120] sm:$0xff]
          %v440 = vld [vmem:[%s329 + $0x128] sm:$0xff]
          %v441 = vld [vmem:[%s329 + $0x130] sm:$0xff]
          %v442 = vld [vmem:[%s329 + $0x138] sm:$0xff]
          %v443 = vld [vmem:[%s329 + $0x140] sm:$0xff]
          %v444 = vld [vmem:[%s329 + $0x148] sm:$0xff]
          %v445 = vld [vmem:[%s329 + $0x150] sm:$0xff]
          %v446 = vld [vmem:[%s329 + $0x158] sm:$0xff]
          %v447 = vld [vmem:[%s329 + $0x160] sm:$0xff]
          %v448 = vld [vmem:[%s329 + $0x168] sm:$0xff]
          %v449 = vld [vmem:[%s329 + $0x170] sm:$0xff]
          %v450 = vld [vmem:[%s329 + $0x178] sm:$0xff]
          %v451 = vld [vmem:[%s329 + $0x180] sm:$0xff]
          %v452 = vld [vmem:[%s329 + $0x188] sm:$0xff]
          %v453 = vld [vmem:[%s329 + $0x190] sm:$0xff]
          %v454 = vld [vmem:[%s329 + $0x198] sm:$0xff]
          %v455 = vld [vmem:[%s329 + $0x1a0] sm:$0xff]
          %v456 = vld [vmem:[%s329 + $0x1a8] sm:$0xff]
          %v457 = vld [vmem:[%s329 + $0x1b0] sm:$0xff]
          %v458 = vld [vmem:[%s329 + $0x1b8] sm:$0xff]
          %v459 = vld [vmem:[%s329 + $0x1c0] sm:$0xff]
          %v460 = vld [vmem:[%s329 + $0x1c8] sm:$0xff]
          %v461 = vld [vmem:[%s329 + $0x1d0] sm:$0xff]
          %v462 = vld [vmem:[%s329 + $0x1d8] sm:$0xff]
          %v463 = vld [vmem:[%s329 + $0x1e0] sm:$0xff]
          %v464 = vld [vmem:[%s329 + $0x1e8] sm:$0xff]
          %v465 = vld [vmem:[%s329 + $0x1f0] sm:$0xff]
          %v466 = vld [vmem:[%s329 + $0x1f8] sm:$0xff]
          %v467 = vld [vmem:[%s329 + $0x200] sm:$0xff]
          %v468 = vld [vmem:[%s329 + $0x208] sm:$0xff]
          %v469 = vld [vmem:[%s329 + $0x210] sm:$0xff]
          %v470 = vld [vmem:[%s329 + $0x218] sm:$0xff]
          %v471 = vld [vmem:[%s329 + $0x220] sm:$0xff]
          %v472 = vld [vmem:[%s329 + $0x228] sm:$0xff]
          %v473 = vld [vmem:[%s329 + $0x230] sm:$0xff]
          %v474 = vld [vmem:[%s329 + $0x238] sm:$0xff]
          %v475 = vld [vmem:[%s329 + $0x240] sm:$0xff]
          %v476 = vld [vmem:[%s329 + $0x248] sm:$0xff]
          %v477 = vld [vmem:[%s329 + $0x250] sm:$0xff]
          %v478 = vld [vmem:[%s329 + $0x258] sm:$0xff]
          %v479 = vld [vmem:[%s329 + $0x260] sm:$0xff]
          %v480 = vld [vmem:[%s329 + $0x268] sm:$0xff]
          %v481 = vld [vmem:[%s329 + $0x270] sm:$0xff]
          %v482 = vld [vmem:[%s329 + $0x278] sm:$0xff]
          %v483 = vld [vmem:[%s329 + $0x280] sm:$0xff]
          %v484 = vld [vmem:[%s329 + $0x288] sm:$0xff]
          %v485 = vld [vmem:[%s329 + $0x290] sm:$0xff]
          %v486 = vld [vmem:[%s329 + $0x298] sm:$0xff]
          %v487 = vld [vmem:[%s329 + $0x2a0] sm:$0xff]
          %v488 = vld [vmem:[%s329 + $0x2a8] sm:$0xff]
          %v489 = vld [vmem:[%s329 + $0x2b0] sm:$0xff]
          %v490 = vld [vmem:[%s329 + $0x2b8] sm:$0xff]
          %v491 = vld [vmem:[%s329 + $0x2c0] sm:$0xff]
          %v492 = vld [vmem:[%s329 + $0x2c8] sm:$0xff]
          %v493 = vld [vmem:[%s329 + $0x2d0] sm:$0xff]
          %v494 = vld [vmem:[%s329 + $0x2d8] sm:$0xff]
          %v495 = vld [vmem:[%s329 + $0x2e0] sm:$0xff]
          %v496 = vld [vmem:[%s329 + $0x2e8] sm:$0xff]
          %v497 = vld [vmem:[%s329 + $0x2f0] sm:$0xff]
          %v498 = vld [vmem:[%s329 + $0x2f8] sm:$0xff]
          %v499 = vld [vmem:[%s329 + $0x300] sm:$0xff]
          %v500 = vld [vmem:[%s329 + $0x308] sm:$0xff]
          %v501 = vld [vmem:[%s329 + $0x310] sm:$0xff]
          %v502 = vld [vmem:[%s329 + $0x318] sm:$0xff]
          %v503 = vld [vmem:[%s329 + $0x320] sm:$0xff]
          %v504 = vld [vmem:[%s329 + $0x328] sm:$0xff]
          %v505 = vld [vmem:[%s329 + $0x330] sm:$0xff]
          %v506 = vld [vmem:[%s329 + $0x338] sm:$0xff]
          %v507 = vld [vmem:[%s329 + $0x340] sm:$0xff]
          %v508 = vld [vmem:[%s329 + $0x348] sm:$0xff]
          %v509 = vld [vmem:[%s329 + $0x350] sm:$0xff]
          %v510 = vld [vmem:[%s329 + $0x358] sm:$0xff]
          %v511 = vld [vmem:[%s329 + $0x360] sm:$0xff]
          %v512 = vld [vmem:[%s329 + $0x368] sm:$0xff]
          %v513 = vld [vmem:[%s329 + $0x370] sm:$0xff]
          %v514 = vld [vmem:[%s329 + $0x378] sm:$0xff]
          %v515 = vld [vmem:[%s329 + $0x380] sm:$0xff]
          %v516 = vld [vmem:[%s329 + $0x388] sm:$0xff]
          %v517 = vld [vmem:[%s329 + $0x390] sm:$0xff]
          %v518 = vld [vmem:[%s329 + $0x398] sm:$0xff]
          %v519 = vld [vmem:[%s329 + $0x3a0] sm:$0xff]
          %v520 = vld [vmem:[%s329 + $0x3a8] sm:$0xff]
          %v521 = vld [vmem:[%s329 + $0x3b0] sm:$0xff]
          %v522 = vld [vmem:[%s329 + $0x3b8] sm:$0xff]
          %v523 = vld [vmem:[%s329 + $0x3c0] sm:$0xff]
          %v524 = vld [vmem:[%s329 + $0x3c8] sm:$0xff]
          %v525 = vld [vmem:[%s329 + $0x3d0] sm:$0xff]
          %v526 = vld [vmem:[%s329 + $0x3d8] sm:$0xff]
          %v527 = vld [vmem:[%s329 + $0x3e0] sm:$0xff]
          %v528 = vld [vmem:[%s329 + $0x3e8] sm:$0xff]
          %v529 = vld [vmem:[%s329 + $0x3f0] sm:$0xff]
          %v530 = vld [vmem:[%s329 + $0x3f8] sm:$0xff]
          %v531 = vld [vmem:[#allocation2] sm:$0xff]
          %v532 = vld [vmem:[#allocation2 + $0x8] sm:$0xff]
          %v533 = vld [vmem:[#allocation2 + $0x10] sm:$0xff]
          %v534 = vld [vmem:[#allocation2 + $0x18] sm:$0xff]
          %v535 = vld [vmem:[%s311] sm:$0xff]
          %v536 = vld [vmem:[%s311 + $0x8] sm:$0xff]
          %v537 = vld [vmem:[%s311 + $0x10] sm:$0xff]
          %v538 = vld [vmem:[%s311 + $0x18] sm:$0xff]
          %v539 = vld [vmem:[%s311 + $0x20] sm:$0xff]
          %v540 = vld [vmem:[%s311 + $0x28] sm:$0xff]
          %v541 = vld [vmem:[%s311 + $0x30] sm:$0xff]
          %v542 = vld [vmem:[%s311 + $0x38] sm:$0xff]
          %v543 = vld [vmem:[%s320] sm:$0xff]
          %v544 = vld [vmem:[%s320 + $0x8] sm:$0xff]
          %v545 = vld [vmem:[%s320 + $0x10] sm:$0xff]
          %v546 = vld [vmem:[%s320 + $0x18] sm:$0xff]
          %v547 = vld [vmem:[%s320 + $0x20] sm:$0xff]
          %v548 = vld [vmem:[%s320 + $0x28] sm:$0xff]
          %v549 = vld [vmem:[%s320 + $0x30] sm:$0xff]
          %v550 = vld [vmem:[%s320 + $0x38] sm:$0xff]
          %v559 = vunpack.c.l.b16 %v543
          %v560 = vunpack.c.h.b16 %v543
          %v561 = vunpack.c.l.b16 %v544
          %v562 = vunpack.c.h.b16 %v544
          %v563 = vunpack.c.l.b16 %v545
          %v564 = vunpack.c.h.b16 %v545
          %v565 = vunpack.c.l.b16 %v546
          %v566 = vunpack.c.h.b16 %v546
          %v567 = vunpack.c.l.b16 %v547
          %v568 = vunpack.c.h.b16 %v547
          %v569 = vunpack.c.l.b16 %v548
          %v570 = vunpack.c.h.b16 %v548
          %v571 = vunpack.c.l.b16 %v549
          %v572 = vunpack.c.h.b16 %v549
          %v573 = vunpack.c.l.b16 %v550
          %v574 = vunpack.c.h.b16 %v550
          %v575 = vpack.c.b16 %v567, %v559
          %v576 = vpack.c.b16 %v568, %v560
          %v577 = vpack.c.b16 %v569, %v561
          %v578 = vpack.c.b16 %v570, %v562
          %v579 = vpack.c.b16 %v571, %v563
          %v580 = vpack.c.b16 %v572, %v564
          %v581 = vpack.c.b16 %v573, %v565
          %v582 = vpack.c.b16 %v574, %v566
          %v719 = vunpack.c.l.b16 %v403
          %v720 = vunpack.c.h.b16 %v403
          %v721 = vunpack.c.l.b16 %v404
          %v722 = vunpack.c.h.b16 %v404
          %v723 = vunpack.c.l.b16 %v405
          %v724 = vunpack.c.h.b16 %v405
          %v725 = vunpack.c.l.b16 %v406
          %v726 = vunpack.c.h.b16 %v406
          %v727 = vunpack.c.l.b16 %v407
          %v728 = vunpack.c.h.b16 %v407
          %v729 = vunpack.c.l.b16 %v408
          %v730 = vunpack.c.h.b16 %v408
          %v731 = vunpack.c.l.b16 %v409
          %v732 = vunpack.c.h.b16 %v409
          %v733 = vunpack.c.l.b16 %v410
          %v734 = vunpack.c.h.b16 %v410
          %v735 = vunpack.c.l.b16 %v411
          %v736 = vunpack.c.h.b16 %v411
          %v737 = vunpack.c.l.b16 %v412
          %v738 = vunpack.c.h.b16 %v412
          %v739 = vunpack.c.l.b16 %v413
          %v740 = vunpack.c.h.b16 %v413
          %v741 = vunpack.c.l.b16 %v414
          %v742 = vunpack.c.h.b16 %v414
          %v743 = vunpack.c.l.b16 %v415
          %v744 = vunpack.c.h.b16 %v415
          %v745 = vunpack.c.l.b16 %v416
          %v746 = vunpack.c.h.b16 %v416
          %v747 = vunpack.c.l.b16 %v417
          %v748 = vunpack.c.h.b16 %v417
          %v749 = vunpack.c.l.b16 %v418
          %v750 = vunpack.c.h.b16 %v418
          %v751 = vunpack.c.l.b16 %v419
          %v752 = vunpack.c.h.b16 %v419
          %v753 = vunpack.c.l.b16 %v420
          %v754 = vunpack.c.h.b16 %v420
          %v755 = vunpack.c.l.b16 %v421
          %v756 = vunpack.c.h.b16 %v421
          %v757 = vunpack.c.l.b16 %v422
          %v758 = vunpack.c.h.b16 %v422
          %v759 = vunpack.c.l.b16 %v423
          %v760 = vunpack.c.h.b16 %v423
          %v761 = vunpack.c.l.b16 %v424
          %v762 = vunpack.c.h.b16 %v424
          %v763 = vunpack.c.l.b16 %v425
          %v764 = vunpack.c.h.b16 %v425
          %v765 = vunpack.c.l.b16 %v426
          %v766 = vunpack.c.h.b16 %v426
          %v767 = vunpack.c.l.b16 %v427
          %v768 = vunpack.c.h.b16 %v427
          %v769 = vunpack.c.l.b16 %v428
          %v770 = vunpack.c.h.b16 %v428
          %v771 = vunpack.c.l.b16 %v429
          %v772 = vunpack.c.h.b16 %v429
          %v773 = vunpack.c.l.b16 %v430
          %v774 = vunpack.c.h.b16 %v430
          %v775 = vunpack.c.l.b16 %v431
          %v776 = vunpack.c.h.b16 %v431
          %v777 = vunpack.c.l.b16 %v432
          %v778 = vunpack.c.h.b16 %v432
          %v779 = vunpack.c.l.b16 %v433
          %v780 = vunpack.c.h.b16 %v433
          %v781 = vunpack.c.l.b16 %v434
          %v782 = vunpack.c.h.b16 %v434
          %v783 = vunpack.c.l.b16 %v435
          %v784 = vunpack.c.h.b16 %v435
          %v785 = vunpack.c.l.b16 %v436
          %v786 = vunpack.c.h.b16 %v436
          %v787 = vunpack.c.l.b16 %v437
          %v788 = vunpack.c.h.b16 %v437
          %v789 = vunpack.c.l.b16 %v438
          %v790 = vunpack.c.h.b16 %v438
          %v791 = vunpack.c.l.b16 %v439
          %v792 = vunpack.c.h.b16 %v439
          %v793 = vunpack.c.l.b16 %v440
          %v794 = vunpack.c.h.b16 %v440
          %v795 = vunpack.c.l.b16 %v441
          %v796 = vunpack.c.h.b16 %v441
          %v797 = vunpack.c.l.b16 %v442
          %v798 = vunpack.c.h.b16 %v442
          %v799 = vunpack.c.l.b16 %v443
          %v800 = vunpack.c.h.b16 %v443
          %v801 = vunpack.c.l.b16 %v444
          %v802 = vunpack.c.h.b16 %v444
          %v803 = vunpack.c.l.b16 %v445
          %v804 = vunpack.c.h.b16 %v445
          %v805 = vunpack.c.l.b16 %v446
          %v806 = vunpack.c.h.b16 %v446
          %v807 = vunpack.c.l.b16 %v447
          %v808 = vunpack.c.h.b16 %v447
          %v809 = vunpack.c.l.b16 %v448
          %v810 = vunpack.c.h.b16 %v448
          %v811 = vunpack.c.l.b16 %v449
          %v812 = vunpack.c.h.b16 %v449
          %v813 = vunpack.c.l.b16 %v450
          %v814 = vunpack.c.h.b16 %v450
          %v815 = vunpack.c.l.b16 %v451
          %v816 = vunpack.c.h.b16 %v451
          %v817 = vunpack.c.l.b16 %v452
          %v818 = vunpack.c.h.b16 %v452
          %v819 = vunpack.c.l.b16 %v453
          %v820 = vunpack.c.h.b16 %v453
          %v821 = vunpack.c.l.b16 %v454
          %v822 = vunpack.c.h.b16 %v454
          %v823 = vunpack.c.l.b16 %v455
          %v824 = vunpack.c.h.b16 %v455
          %v825 = vunpack.c.l.b16 %v456
          %v826 = vunpack.c.h.b16 %v456
          %v827 = vunpack.c.l.b16 %v457
          %v828 = vunpack.c.h.b16 %v457
          %v829 = vunpack.c.l.b16 %v458
          %v830 = vunpack.c.h.b16 %v458
          %v831 = vunpack.c.l.b16 %v459
          %v832 = vunpack.c.h.b16 %v459
          %v833 = vunpack.c.l.b16 %v460
          %v834 = vunpack.c.h.b16 %v460
          %v835 = vunpack.c.l.b16 %v461
          %v836 = vunpack.c.h.b16 %v461
          %v837 = vunpack.c.l.b16 %v462
          %v838 = vunpack.c.h.b16 %v462
          %v839 = vunpack.c.l.b16 %v463
          %v840 = vunpack.c.h.b16 %v463
          %v841 = vunpack.c.l.b16 %v464
          %v842 = vunpack.c.h.b16 %v464
          %v843 = vunpack.c.l.b16 %v465
          %v844 = vunpack.c.h.b16 %v465
          %v845 = vunpack.c.l.b16 %v466
          %v846 = vunpack.c.h.b16 %v466
          %v847 = vunpack.c.l.b16 %v467
          %v848 = vunpack.c.h.b16 %v467
          %v849 = vunpack.c.l.b16 %v468
          %v850 = vunpack.c.h.b16 %v468
          %v851 = vunpack.c.l.b16 %v469
          %v852 = vunpack.c.h.b16 %v469
          %v853 = vunpack.c.l.b16 %v470
          %v854 = vunpack.c.h.b16 %v470
          %v855 = vunpack.c.l.b16 %v471
          %v856 = vunpack.c.h.b16 %v471
          %v857 = vunpack.c.l.b16 %v472
          %v858 = vunpack.c.h.b16 %v472
          %v859 = vunpack.c.l.b16 %v473
          %v860 = vunpack.c.h.b16 %v473
          %v861 = vunpack.c.l.b16 %v474
          %v862 = vunpack.c.h.b16 %v474
          %v863 = vunpack.c.l.b16 %v475
          %v864 = vunpack.c.h.b16 %v475
          %v865 = vunpack.c.l.b16 %v476
          %v866 = vunpack.c.h.b16 %v476
          %v867 = vunpack.c.l.b16 %v477
          %v868 = vunpack.c.h.b16 %v477
          %v869 = vunpack.c.l.b16 %v478
          %v870 = vunpack.c.h.b16 %v478
          %v871 = vunpack.c.l.b16 %v479
          %v872 = vunpack.c.h.b16 %v479
          %v873 = vunpack.c.l.b16 %v480
          %v874 = vunpack.c.h.b16 %v480
          %v875 = vunpack.c.l.b16 %v481
          %v876 = vunpack.c.h.b16 %v481
          %v877 = vunpack.c.l.b16 %v482
          %v878 = vunpack.c.h.b16 %v482
          %v879 = vunpack.c.l.b16 %v483
          %v880 = vunpack.c.h.b16 %v483
          %v881 = vunpack.c.l.b16 %v484
          %v882 = vunpack.c.h.b16 %v484
          %v883 = vunpack.c.l.b16 %v485
          %v884 = vunpack.c.h.b16 %v485
          %v885 = vunpack.c.l.b16 %v486
          %v886 = vunpack.c.h.b16 %v486
          %v887 = vunpack.c.l.b16 %v487
          %v888 = vunpack.c.h.b16 %v487
          %v889 = vunpack.c.l.b16 %v488
          %v890 = vunpack.c.h.b16 %v488
          %v891 = vunpack.c.l.b16 %v489
          %v892 = vunpack.c.h.b16 %v489
          %v893 = vunpack.c.l.b16 %v490
          %v894 = vunpack.c.h.b16 %v490
          %v895 = vunpack.c.l.b16 %v491
          %v896 = vunpack.c.h.b16 %v491
          %v897 = vunpack.c.l.b16 %v492
          %v898 = vunpack.c.h.b16 %v492
          %v899 = vunpack.c.l.b16 %v493
          %v900 = vunpack.c.h.b16 %v493
          %v901 = vunpack.c.l.b16 %v494
          %v902 = vunpack.c.h.b16 %v494
          %v903 = vunpack.c.l.b16 %v495
          %v904 = vunpack.c.h.b16 %v495
          %v905 = vunpack.c.l.b16 %v496
          %v906 = vunpack.c.h.b16 %v496
          %v907 = vunpack.c.l.b16 %v497
          %v908 = vunpack.c.h.b16 %v497
          %v909 = vunpack.c.l.b16 %v498
          %v910 = vunpack.c.h.b16 %v498
          %v911 = vunpack.c.l.b16 %v499
          %v912 = vunpack.c.h.b16 %v499
          %v913 = vunpack.c.l.b16 %v500
          %v914 = vunpack.c.h.b16 %v500
          %v915 = vunpack.c.l.b16 %v501
          %v916 = vunpack.c.h.b16 %v501
          %v917 = vunpack.c.l.b16 %v502
          %v918 = vunpack.c.h.b16 %v502
          %v919 = vunpack.c.l.b16 %v503
          %v920 = vunpack.c.h.b16 %v503
          %v921 = vunpack.c.l.b16 %v504
          %v922 = vunpack.c.h.b16 %v504
          %v923 = vunpack.c.l.b16 %v505
          %v924 = vunpack.c.h.b16 %v505
          %v925 = vunpack.c.l.b16 %v506
          %v926 = vunpack.c.h.b16 %v506
          %v927 = vunpack.c.l.b16 %v507
          %v928 = vunpack.c.h.b16 %v507
          %v929 = vunpack.c.l.b16 %v508
          %v930 = vunpack.c.h.b16 %v508
          %v931 = vunpack.c.l.b16 %v509
          %v932 = vunpack.c.h.b16 %v509
          %v933 = vunpack.c.l.b16 %v510
          %v934 = vunpack.c.h.b16 %v510
          %v935 = vunpack.c.l.b16 %v511
          %v936 = vunpack.c.h.b16 %v511
          %v937 = vunpack.c.l.b16 %v512
          %v938 = vunpack.c.h.b16 %v512
          %v939 = vunpack.c.l.b16 %v513
          %v940 = vunpack.c.h.b16 %v513
          %v941 = vunpack.c.l.b16 %v514
          %v942 = vunpack.c.h.b16 %v514
          %v943 = vunpack.c.l.b16 %v515
          %v944 = vunpack.c.h.b16 %v515
          %v945 = vunpack.c.l.b16 %v516
          %v946 = vunpack.c.h.b16 %v516
          %v947 = vunpack.c.l.b16 %v517
          %v948 = vunpack.c.h.b16 %v517
          %v949 = vunpack.c.l.b16 %v518
          %v950 = vunpack.c.h.b16 %v518
          %v951 = vunpack.c.l.b16 %v519
          %v952 = vunpack.c.h.b16 %v519
          %v953 = vunpack.c.l.b16 %v520
          %v954 = vunpack.c.h.b16 %v520
          %v955 = vunpack.c.l.b16 %v521
          %v956 = vunpack.c.h.b16 %v521
          %v957 = vunpack.c.l.b16 %v522
          %v958 = vunpack.c.h.b16 %v522
          %v959 = vunpack.c.l.b16 %v523
          %v960 = vunpack.c.h.b16 %v523
          %v961 = vunpack.c.l.b16 %v524
          %v962 = vunpack.c.h.b16 %v524
          %v963 = vunpack.c.l.b16 %v525
          %v964 = vunpack.c.h.b16 %v525
          %v965 = vunpack.c.l.b16 %v526
          %v966 = vunpack.c.h.b16 %v526
          %v967 = vunpack.c.l.b16 %v527
          %v968 = vunpack.c.h.b16 %v527
          %v969 = vunpack.c.l.b16 %v528
          %v970 = vunpack.c.h.b16 %v528
          %v971 = vunpack.c.l.b16 %v529
          %v972 = vunpack.c.h.b16 %v529
          %v973 = vunpack.c.l.b16 %v530
          %v974 = vunpack.c.h.b16 %v530
          %v975 = vpack.c.b16 %v721, %v719
          %v976 = vpack.c.b16 %v722, %v720
          %v977 = vpack.c.b16 %v725, %v723
          %v978 = vpack.c.b16 %v726, %v724
          %v979 = vpack.c.b16 %v729, %v727
          %v980 = vpack.c.b16 %v730, %v728
          %v981 = vpack.c.b16 %v733, %v731
          %v982 = vpack.c.b16 %v734, %v732
          %v983 = vpack.c.b16 %v737, %v735
          %v984 = vpack.c.b16 %v738, %v736
          %v985 = vpack.c.b16 %v741, %v739
          %v986 = vpack.c.b16 %v742, %v740
          %v987 = vpack.c.b16 %v745, %v743
          %v988 = vpack.c.b16 %v746, %v744
          %v989 = vpack.c.b16 %v749, %v747
          %v990 = vpack.c.b16 %v750, %v748
          %v991 = vpack.c.b16 %v753, %v751
          %v992 = vpack.c.b16 %v754, %v752
          %v993 = vpack.c.b16 %v757, %v755
          %v994 = vpack.c.b16 %v758, %v756
          %v995 = vpack.c.b16 %v761, %v759
          %v996 = vpack.c.b16 %v762, %v760
          %v997 = vpack.c.b16 %v765, %v763
          %v998 = vpack.c.b16 %v766, %v764
          %v999 = vpack.c.b16 %v769, %v767
          %v1000 = vpack.c.b16 %v770, %v768
          %v1001 = vpack.c.b16 %v773, %v771
          %v1002 = vpack.c.b16 %v774, %v772
          %v1003 = vpack.c.b16 %v777, %v775
          %v1004 = vpack.c.b16 %v778, %v776
          %v1005 = vpack.c.b16 %v781, %v779
          %v1006 = vpack.c.b16 %v782, %v780
          %v1007 = vpack.c.b16 %v785, %v783
          %v1008 = vpack.c.b16 %v786, %v784
          %v1009 = vpack.c.b16 %v789, %v787
          %v1010 = vpack.c.b16 %v790, %v788
          %v1011 = vpack.c.b16 %v793, %v791
          %v1012 = vpack.c.b16 %v794, %v792
          %v1013 = vpack.c.b16 %v797, %v795
          %v1014 = vpack.c.b16 %v798, %v796
          %v1015 = vpack.c.b16 %v801, %v799
          %v1016 = vpack.c.b16 %v802, %v800
          %v1017 = vpack.c.b16 %v805, %v803
          %v1018 = vpack.c.b16 %v806, %v804
          %v1019 = vpack.c.b16 %v809, %v807
          %v1020 = vpack.c.b16 %v810, %v808
          %v1021 = vpack.c.b16 %v813, %v811
          %v1022 = vpack.c.b16 %v814, %v812
          %v1023 = vpack.c.b16 %v817, %v815
          %v1024 = vpack.c.b16 %v818, %v816
          %v1025 = vpack.c.b16 %v821, %v819
          %v1026 = vpack.c.b16 %v822, %v820
          %v1027 = vpack.c.b16 %v825, %v823
          %v1028 = vpack.c.b16 %v826, %v824
          %v1029 = vpack.c.b16 %v829, %v827
          %v1030 = vpack.c.b16 %v830, %v828
          %v1031 = vpack.c.b16 %v833, %v831
          %v1032 = vpack.c.b16 %v834, %v832
          %v1033 = vpack.c.b16 %v837, %v835
          %v1034 = vpack.c.b16 %v838, %v836
          %v1035 = vpack.c.b16 %v841, %v839
          %v1036 = vpack.c.b16 %v842, %v840
          %v1037 = vpack.c.b16 %v845, %v843
          %v1038 = vpack.c.b16 %v846, %v844
          %v1039 = vpack.c.b16 %v849, %v847
          %v1040 = vpack.c.b16 %v850, %v848
          %v1041 = vpack.c.b16 %v853, %v851
          %v1042 = vpack.c.b16 %v854, %v852
          %v1043 = vpack.c.b16 %v857, %v855
          %v1044 = vpack.c.b16 %v858, %v856
          %v1045 = vpack.c.b16 %v861, %v859
          %v1046 = vpack.c.b16 %v862, %v860
          %v1047 = vpack.c.b16 %v865, %v863
          %v1048 = vpack.c.b16 %v866, %v864
          %v1049 = vpack.c.b16 %v869, %v867
          %v1050 = vpack.c.b16 %v870, %v868
          %v1051 = vpack.c.b16 %v873, %v871
          %v1052 = vpack.c.b16 %v874, %v872
          %v1053 = vpack.c.b16 %v877, %v875
          %v1054 = vpack.c.b16 %v878, %v876
          %v1055 = vpack.c.b16 %v881, %v879
          %v1056 = vpack.c.b16 %v882, %v880
          %v1057 = vpack.c.b16 %v885, %v883
          %v1058 = vpack.c.b16 %v886, %v884
          %v1059 = vpack.c.b16 %v889, %v887
          %v1060 = vpack.c.b16 %v890, %v888
          %v1061 = vpack.c.b16 %v893, %v891
          %v1062 = vpack.c.b16 %v894, %v892
          %v1063 = vpack.c.b16 %v897, %v895
          %v1064 = vpack.c.b16 %v898, %v896
          %v1065 = vpack.c.b16 %v901, %v899
          %v1066 = vpack.c.b16 %v902, %v900
          %v1067 = vpack.c.b16 %v905, %v903
          %v1068 = vpack.c.b16 %v906, %v904
          %v1069 = vpack.c.b16 %v909, %v907
          %v1070 = vpack.c.b16 %v910, %v908
          %v1071 = vpack.c.b16 %v913, %v911
          %v1072 = vpack.c.b16 %v914, %v912
          %v1073 = vpack.c.b16 %v917, %v915
          %v1074 = vpack.c.b16 %v918, %v916
          %v1075 = vpack.c.b16 %v921, %v919
          %v1076 = vpack.c.b16 %v922, %v920
          %v1077 = vpack.c.b16 %v925, %v923
          %v1078 = vpack.c.b16 %v926, %v924
          %v1079 = vpack.c.b16 %v929, %v927
          %v1080 = vpack.c.b16 %v930, %v928
          %v1081 = vpack.c.b16 %v933, %v931
          %v1082 = vpack.c.b16 %v934, %v932
          %v1083 = vpack.c.b16 %v937, %v935
          %v1084 = vpack.c.b16 %v938, %v936
          %v1085 = vpack.c.b16 %v941, %v939
          %v1086 = vpack.c.b16 %v942, %v940
          %v1087 = vpack.c.b16 %v945, %v943
          %v1088 = vpack.c.b16 %v946, %v944
          %v1089 = vpack.c.b16 %v949, %v947
          %v1090 = vpack.c.b16 %v950, %v948
          %v1091 = vpack.c.b16 %v953, %v951
          %v1092 = vpack.c.b16 %v954, %v952
          %v1093 = vpack.c.b16 %v957, %v955
          %v1094 = vpack.c.b16 %v958, %v956
          %v1095 = vpack.c.b16 %v961, %v959
          %v1096 = vpack.c.b16 %v962, %v960
          %v1097 = vpack.c.b16 %v965, %v963
          %v1098 = vpack.c.b16 %v966, %v964
          %v1099 = vpack.c.b16 %v969, %v967
          %v1100 = vpack.c.b16 %v970, %v968
          %v1101 = vpack.c.b16 %v973, %v971
          %v1102 = vpack.c.b16 %v974, %v972
          %1231 = vmatprep.subr.bf16.mxu0 %v976
          %1232 = vmatpush1.bf16.msra.mxu0 %v975
          %1233 = vmatprep.subr.bf16.mxu0 %v978
          %1234 = vmatpush1.bf16.msra.mxu0 %v977
          %1235 = vmatprep.subr.bf16.mxu0 %v980
          %1236 = vmatpush1.bf16.msra.mxu0 %v979
          %1237 = vmatprep.subr.bf16.mxu0 %v982
          %1238 = vmatpush1.bf16.msra.mxu0 %v981
          %1239 = vmatprep.subr.bf16.mxu0 %v984
          %1240 = vmatpush1.bf16.msra.mxu0 %v983
          %1241 = vmatprep.subr.bf16.mxu0 %v986
          %1242 = vmatpush1.bf16.msra.mxu0 %v985
          %1243 = vmatprep.subr.bf16.mxu0 %v988
          %1244 = vmatpush1.bf16.msra.mxu0 %v987
          %1245 = vmatprep.subr.bf16.mxu0 %v990
          %1246 = vmatpush1.bf16.msra.mxu0 %v989
          %1247 = vmatprep.subr.bf16.mxu0 %v992
          %1248 = vmatpush1.bf16.msra.mxu0 %v991
          %1249 = vmatprep.subr.bf16.mxu0 %v994
          %1250 = vmatpush1.bf16.msra.mxu0 %v993
          %1251 = vmatprep.subr.bf16.mxu0 %v996
          %1252 = vmatpush1.bf16.msra.mxu0 %v995
          %1253 = vmatprep.subr.bf16.mxu0 %v998
          %1254 = vmatpush1.bf16.msra.mxu0 %v997
          %1255 = vmatprep.subr.bf16.mxu0 %v1000
          %1256 = vmatpush1.bf16.msra.mxu0 %v999
          %1257 = vmatprep.subr.bf16.mxu0 %v1002
          %1258 = vmatpush1.bf16.msra.mxu0 %v1001
          %1259 = vmatprep.subr.bf16.mxu0 %v1004
          %1260 = vmatpush1.bf16.msra.mxu0 %v1003
          %1261 = vmatprep.subr.bf16.mxu0 %v1006
          %1262 = vmatpush1.bf16.msra.mxu0 %v1005
          %1263 = vmatprep.mubr.bf16.mxu0 %v576
          %1264 = vmatmul.mubr.bf16.gmra.mrb[0].mxu0 %v575
          %v1265 = vpop.f32.mrb[0].mxu0
          %v1266 = vadd.f32 0.0, %v1265
          %v1267 = vpop.f32.mrb[0].mxu0
          %v1268 = vadd.f32 0.0, %v1267
          %v1269 = vpop.f32.mrb[0].mxu0
          %v1270 = vadd.f32 0.0, %v1269
          %v1271 = vpop.f32.mrb[0].mxu0
          %v1272 = vadd.f32 0.0, %v1271
          %1273 = vdwg.mxu0
          %1274 = vmatprep.subr.bf16.mxu0 %v1008
          %1275 = vmatpush1.bf16.msra.mxu0 %v1007
          %1276 = vmatprep.subr.bf16.mxu0 %v1010
          %1277 = vmatpush1.bf16.msra.mxu0 %v1009
          %1278 = vmatprep.subr.bf16.mxu0 %v1012
          %1279 = vmatpush1.bf16.msra.mxu0 %v1011
          %1280 = vmatprep.subr.bf16.mxu0 %v1014
          %1281 = vmatpush1.bf16.msra.mxu0 %v1013
          %1282 = vmatprep.subr.bf16.mxu0 %v1016
          %1283 = vmatpush1.bf16.msra.mxu0 %v1015
          %1284 = vmatprep.subr.bf16.mxu0 %v1018
          %1285 = vmatpush1.bf16.msra.mxu0 %v1017
          %1286 = vmatprep.subr.bf16.mxu0 %v1020
          %1287 = vmatpush1.bf16.msra.mxu0 %v1019
          %1288 = vmatprep.subr.bf16.mxu0 %v1022
          %1289 = vmatpush1.bf16.msra.mxu0 %v1021
          %1290 = vmatprep.subr.bf16.mxu0 %v1024
          %1291 = vmatpush1.bf16.msra.mxu0 %v1023
          %1292 = vmatprep.subr.bf16.mxu0 %v1026
          %1293 = vmatpush1.bf16.msra.mxu0 %v1025
          %1294 = vmatprep.subr.bf16.mxu0 %v1028
          %1295 = vmatpush1.bf16.msra.mxu0 %v1027
          %1296 = vmatprep.subr.bf16.mxu0 %v1030
          %1297 = vmatpush1.bf16.msra.mxu0 %v1029
          %1298 = vmatprep.subr.bf16.mxu0 %v1032
          %1299 = vmatpush1.bf16.msra.mxu0 %v1031
          %1300 = vmatprep.subr.bf16.mxu0 %v1034
          %1301 = vmatpush1.bf16.msra.mxu0 %v1033
          %1302 = vmatprep.subr.bf16.mxu0 %v1036
          %1303 = vmatpush1.bf16.msra.mxu0 %v1035
          %1304 = vmatprep.subr.bf16.mxu0 %v1038
          %1305 = vmatpush1.bf16.msra.mxu0 %v1037
          %1306 = vmatprep.mubr.bf16.mxu0 %v578
          %1307 = vmatmul.mubr.bf16.gmra.mrb[0].mxu0 %v577
          %v1308 = vpop.f32.mrb[0].mxu0
          %v1309 = vadd.f32 %v1266, %v1308
          %v1310 = vpop.f32.mrb[0].mxu0
          %v1311 = vadd.f32 %v1268, %v1310
          %v1312 = vpop.f32.mrb[0].mxu0
          %v1313 = vadd.f32 %v1270, %v1312
          %v1314 = vpop.f32.mrb[0].mxu0
          %v1315 = vadd.f32 %v1272, %v1314
          %1316 = vdwg.mxu0
          %1317 = vmatprep.subr.bf16.mxu0 %v1040
          %1318 = vmatpush1.bf16.msra.mxu0 %v1039
          %1319 = vmatprep.subr.bf16.mxu0 %v1042
          %1320 = vmatpush1.bf16.msra.mxu0 %v1041
          %1321 = vmatprep.subr.bf16.mxu0 %v1044
          %1322 = vmatpush1.bf16.msra.mxu0 %v1043
          %1323 = vmatprep.subr.bf16.mxu0 %v1046
          %1324 = vmatpush1.bf16.msra.mxu0 %v1045
          %1325 = vmatprep.subr.bf16.mxu0 %v1048
          %1326 = vmatpush1.bf16.msra.mxu0 %v1047
          %1327 = vmatprep.subr.bf16.mxu0 %v1050
          %1328 = vmatpush1.bf16.msra.mxu0 %v1049
          %1329 = vmatprep.subr.bf16.mxu0 %v1052
          %1330 = vmatpush1.bf16.msra.mxu0 %v1051
          %1331 = vmatprep.subr.bf16.mxu0 %v1054
          %1332 = vmatpush1.bf16.msra.mxu0 %v1053
          %1333 = vmatprep.subr.bf16.mxu0 %v1056
          %1334 = vmatpush1.bf16.msra.mxu0 %v1055
          %1335 = vmatprep.subr.bf16.mxu0 %v1058
          %1336 = vmatpush1.bf16.msra.mxu0 %v1057
          %1337 = vmatprep.subr.bf16.mxu0 %v1060
          %1338 = vmatpush1.bf16.msra.mxu0 %v1059
          %1339 = vmatprep.subr.bf16.mxu0 %v1062
          %1340 = vmatpush1.bf16.msra.mxu0 %v1061
          %1341 = vmatprep.subr.bf16.mxu0 %v1064
          %1342 = vmatpush1.bf16.msra.mxu0 %v1063
          %1343 = vmatprep.subr.bf16.mxu0 %v1066
          %1344 = vmatpush1.bf16.msra.mxu0 %v1065
          %1345 = vmatprep.subr.bf16.mxu0 %v1068
          %1346 = vmatpush1.bf16.msra.mxu0 %v1067
          %1347 = vmatprep.subr.bf16.mxu0 %v1070
          %1348 = vmatpush1.bf16.msra.mxu0 %v1069
          %1349 = vmatprep.mubr.bf16.mxu0 %v580
          %1350 = vmatmul.mubr.bf16.gmra.mrb[0].mxu0 %v579
          %v1351 = vpop.f32.mrb[0].mxu0
          %v1352 = vadd.f32 %v1309, %v1351
          %v1353 = vpop.f32.mrb[0].mxu0
          %v1354 = vadd.f32 %v1311, %v1353
          %v1355 = vpop.f32.mrb[0].mxu0
          %v1356 = vadd.f32 %v1313, %v1355
          %v1357 = vpop.f32.mrb[0].mxu0
          %v1358 = vadd.f32 %v1315, %v1357
          %1359 = vdwg.mxu0
          %1360 = vmatprep.subr.bf16.mxu0 %v1072
          %1361 = vmatpush1.bf16.msra.mxu0 %v1071
          %1362 = vmatprep.subr.bf16.mxu0 %v1074
          %1363 = vmatpush1.bf16.msra.mxu0 %v1073
          %1364 = vmatprep.subr.bf16.mxu0 %v1076
          %1365 = vmatpush1.bf16.msra.mxu0 %v1075
          %1366 = vmatprep.subr.bf16.mxu0 %v1078
          %1367 = vmatpush1.bf16.msra.mxu0 %v1077
          %1368 = vmatprep.subr.bf16.mxu0 %v1080
          %1369 = vmatpush1.bf16.msra.mxu0 %v1079
          %1370 = vmatprep.subr.bf16.mxu0 %v1082
          %1371 = vmatpush1.bf16.msra.mxu0 %v1081
          %1372 = vmatprep.subr.bf16.mxu0 %v1084
          %1373 = vmatpush1.bf16.msra.mxu0 %v1083
          %1374 = vmatprep.subr.bf16.mxu0 %v1086
          %1375 = vmatpush1.bf16.msra.mxu0 %v1085
          %1376 = vmatprep.subr.bf16.mxu0 %v1088
          %1377 = vmatpush1.bf16.msra.mxu0 %v1087
          %1378 = vmatprep.subr.bf16.mxu0 %v1090
          %1379 = vmatpush1.bf16.msra.mxu0 %v1089
          %1380 = vmatprep.subr.bf16.mxu0 %v1092
          %1381 = vmatpush1.bf16.msra.mxu0 %v1091
          %1382 = vmatprep.subr.bf16.mxu0 %v1094
          %1383 = vmatpush1.bf16.msra.mxu0 %v1093
          %1384 = vmatprep.subr.bf16.mxu0 %v1096
          %1385 = vmatpush1.bf16.msra.mxu0 %v1095
          %1386 = vmatprep.subr.bf16.mxu0 %v1098
          %1387 = vmatpush1.bf16.msra.mxu0 %v1097
          %1388 = vmatprep.subr.bf16.mxu0 %v1100
          %1389 = vmatpush1.bf16.msra.mxu0 %v1099
          %1390 = vmatprep.subr.bf16.mxu0 %v1102
          %1391 = vmatpush1.bf16.msra.mxu0 %v1101
          %1392 = vmatprep.mubr.bf16.mxu0 %v582
          %1393 = vmatmul.mubr.bf16.gmra.mrb[0].mxu0 %v581
          %v1394 = vpop.f32.mrb[0].mxu0
          %v1395 = vadd.f32 %v1352, %v1394
          %v1396 = vpop.f32.mrb[0].mxu0
          %v1397 = vadd.f32 %v1354, %v1396
          %v1398 = vpop.f32.mrb[0].mxu0
          %v1399 = vadd.f32 %v1356, %v1398
          %v1400 = vpop.f32.mrb[0].mxu0
          %v1401 = vadd.f32 %v1358, %v1400
          %1402 = vdwg.mxu0
          %v1411 = vunpack.c.l.b16 %v535
          %v1412 = vunpack.c.h.b16 %v535
          %v1413 = vunpack.c.l.b16 %v536
          %v1414 = vunpack.c.h.b16 %v536
          %v1415 = vunpack.c.l.b16 %v537
          %v1416 = vunpack.c.h.b16 %v537
          %v1417 = vunpack.c.l.b16 %v538
          %v1418 = vunpack.c.h.b16 %v538
          %v1419 = vunpack.c.l.b16 %v539
          %v1420 = vunpack.c.h.b16 %v539
          %v1421 = vunpack.c.l.b16 %v540
          %v1422 = vunpack.c.h.b16 %v540
          %v1423 = vunpack.c.l.b16 %v541
          %v1424 = vunpack.c.h.b16 %v541
          %v1425 = vunpack.c.l.b16 %v542
          %v1426 = vunpack.c.h.b16 %v542
          %v1427 = vpack.c.b16 %v1419, %v1411
          %v1428 = vpack.c.b16 %v1420, %v1412
          %v1429 = vpack.c.b16 %v1421, %v1413
          %v1430 = vpack.c.b16 %v1422, %v1414
          %v1431 = vpack.c.b16 %v1423, %v1415
          %v1432 = vpack.c.b16 %v1424, %v1416
          %v1433 = vpack.c.b16 %v1425, %v1417
          %v1434 = vpack.c.b16 %v1426, %v1418
          %1443 = vmatprep.subr.bf16.mxu0 %v976
          %1444 = vmatpush1.bf16.msra.mxu0 %v975
          %1445 = vmatprep.subr.bf16.mxu0 %v978
          %1446 = vmatpush1.bf16.msra.mxu0 %v977
          %1447 = vmatprep.subr.bf16.mxu0 %v980
          %1448 = vmatpush1.bf16.msra.mxu0 %v979
          %1449 = vmatprep.subr.bf16.mxu0 %v982
          %1450 = vmatpush1.bf16.msra.mxu0 %v981
          %1451 = vmatprep.subr.bf16.mxu0 %v984
          %1452 = vmatpush1.bf16.msra.mxu0 %v983
          %1453 = vmatprep.subr.bf16.mxu0 %v986
          %1454 = vmatpush1.bf16.msra.mxu0 %v985
          %1455 = vmatprep.subr.bf16.mxu0 %v988
          %1456 = vmatpush1.bf16.msra.mxu0 %v987
          %1457 = vmatprep.subr.bf16.mxu0 %v990
          %1458 = vmatpush1.bf16.msra.mxu0 %v989
          %1459 = vmatprep.subr.bf16.mxu0 %v992
          %1460 = vmatpush1.bf16.msra.mxu0 %v991
          %1461 = vmatprep.subr.bf16.mxu0 %v994
          %1462 = vmatpush1.bf16.msra.mxu0 %v993
          %1463 = vmatprep.subr.bf16.mxu0 %v996
          %1464 = vmatpush1.bf16.msra.mxu0 %v995
          %1465 = vmatprep.subr.bf16.mxu0 %v998
          %1466 = vmatpush1.bf16.msra.mxu0 %v997
          %1467 = vmatprep.subr.bf16.mxu0 %v1000
          %1468 = vmatpush1.bf16.msra.mxu0 %v999
          %1469 = vmatprep.subr.bf16.mxu0 %v1002
          %1470 = vmatpush1.bf16.msra.mxu0 %v1001
          %1471 = vmatprep.subr.bf16.mxu0 %v1004
          %1472 = vmatpush1.bf16.msra.mxu0 %v1003
          %1473 = vmatprep.subr.bf16.mxu0 %v1006
          %1474 = vmatpush1.bf16.msra.mxu0 %v1005
          %1475 = vmatprep.mubr.bf16.mxu0 %v1428
          %1476 = vmatmul.mubr.bf16.gmra.mrb[0].mxu0 %v1427
          %v1477 = vpop.f32.mrb[0].mxu0
          %v1478 = vadd.f32 %v1395, %v1477
          %v1479 = vpop.f32.mrb[0].mxu0
          %v1480 = vadd.f32 %v1397, %v1479
          %v1481 = vpop.f32.mrb[0].mxu0
          %v1482 = vadd.f32 %v1399, %v1481
          %v1483 = vpop.f32.mrb[0].mxu0
          %v1484 = vadd.f32 %v1401, %v1483
          %1485 = vdwg.mxu0
          %1486 = vmatprep.subr.bf16.mxu0 %v1008
          %1487 = vmatpush1.bf16.msra.mxu0 %v1007
          %1488 = vmatprep.subr.bf16.mxu0 %v1010
          %1489 = vmatpush1.bf16.msra.mxu0 %v1009
          %1490 = vmatprep.subr.bf16.mxu0 %v1012
          %1491 = vmatpush1.bf16.msra.mxu0 %v1011
          %1492 = vmatprep.subr.bf16.mxu0 %v1014
          %1493 = vmatpush1.bf16.msra.mxu0 %v1013
          %1494 = vmatprep.subr.bf16.mxu0 %v1016
          %1495 = vmatpush1.bf16.msra.mxu0 %v1015
          %1496 = vmatprep.subr.bf16.mxu0 %v1018
          %1497 = vmatpush1.bf16.msra.mxu0 %v1017
          %1498 = vmatprep.subr.bf16.mxu0 %v1020
          %1499 = vmatpush1.bf16.msra.mxu0 %v1019
          %1500 = vmatprep.subr.bf16.mxu0 %v1022
          %1501 = vmatpush1.bf16.msra.mxu0 %v1021
          %1502 = vmatprep.subr.bf16.mxu0 %v1024
          %1503 = vmatpush1.bf16.msra.mxu0 %v1023
          %1504 = vmatprep.subr.bf16.mxu0 %v1026
          %1505 = vmatpush1.bf16.msra.mxu0 %v1025
          %1506 = vmatprep.subr.bf16.mxu0 %v1028
          %1507 = vmatpush1.bf16.msra.mxu0 %v1027
          %1508 = vmatprep.subr.bf16.mxu0 %v1030
          %1509 = vmatpush1.bf16.msra.mxu0 %v1029
          %1510 = vmatprep.subr.bf16.mxu0 %v1032
          %1511 = vmatpush1.bf16.msra.mxu0 %v1031
          %1512 = vmatprep.subr.bf16.mxu0 %v1034
          %1513 = vmatpush1.bf16.msra.mxu0 %v1033
          %1514 = vmatprep.subr.bf16.mxu0 %v1036
          %1515 = vmatpush1.bf16.msra.mxu0 %v1035
          %1516 = vmatprep.subr.bf16.mxu0 %v1038
          %1517 = vmatpush1.bf16.msra.mxu0 %v1037
          %1518 = vmatprep.mubr.bf16.mxu0 %v1430
          %1519 = vmatmul.mubr.bf16.gmra.mrb[0].mxu0 %v1429
          %v1520 = vpop.f32.mrb[0].mxu0
          %v1521 = vadd.f32 %v1478, %v1520
          %v1522 = vpop.f32.mrb[0].mxu0
          %v1523 = vadd.f32 %v1480, %v1522
          %v1524 = vpop.f32.mrb[0].mxu0
          %v1525 = vadd.f32 %v1482, %v1524
          %v1526 = vpop.f32.mrb[0].mxu0
          %v1527 = vadd.f32 %v1484, %v1526
          %1528 = vdwg.mxu0
          %1529 = vmatprep.subr.bf16.mxu0 %v1040
          %1530 = vmatpush1.bf16.msra.mxu0 %v1039
          %1531 = vmatprep.subr.bf16.mxu0 %v1042
          %1532 = vmatpush1.bf16.msra.mxu0 %v1041
          %1533 = vmatprep.subr.bf16.mxu0 %v1044
          %1534 = vmatpush1.bf16.msra.mxu0 %v1043
          %1535 = vmatprep.subr.bf16.mxu0 %v1046
          %1536 = vmatpush1.bf16.msra.mxu0 %v1045
          %1537 = vmatprep.subr.bf16.mxu0 %v1048
          %1538 = vmatpush1.bf16.msra.mxu0 %v1047
          %1539 = vmatprep.subr.bf16.mxu0 %v1050
          %1540 = vmatpush1.bf16.msra.mxu0 %v1049
          %1541 = vmatprep.subr.bf16.mxu0 %v1052
          %1542 = vmatpush1.bf16.msra.mxu0 %v1051
          %1543 = vmatprep.subr.bf16.mxu0 %v1054
          %1544 = vmatpush1.bf16.msra.mxu0 %v1053
          %1545 = vmatprep.subr.bf16.mxu0 %v1056
          %1546 = vmatpush1.bf16.msra.mxu0 %v1055
          %1547 = vmatprep.subr.bf16.mxu0 %v1058
          %1548 = vmatpush1.bf16.msra.mxu0 %v1057
          %1549 = vmatprep.subr.bf16.mxu0 %v1060
          %1550 = vmatpush1.bf16.msra.mxu0 %v1059
          %1551 = vmatprep.subr.bf16.mxu0 %v1062
          %1552 = vmatpush1.bf16.msra.mxu0 %v1061
          %1553 = vmatprep.subr.bf16.mxu0 %v1064
          %1554 = vmatpush1.bf16.msra.mxu0 %v1063
          %1555 = vmatprep.subr.bf16.mxu0 %v1066
          %1556 = vmatpush1.bf16.msra.mxu0 %v1065
          %1557 = vmatprep.subr.bf16.mxu0 %v1068
          %1558 = vmatpush1.bf16.msra.mxu0 %v1067
          %1559 = vmatprep.subr.bf16.mxu0 %v1070
          %1560 = vmatpush1.bf16.msra.mxu0 %v1069
          %1561 = vmatprep.mubr.bf16.mxu0 %v1432
          %1562 = vmatmul.mubr.bf16.gmra.mrb[0].mxu0 %v1431
          %v1563 = vpop.f32.mrb[0].mxu0
          %v1564 = vadd.f32 %v1521, %v1563
          %v1565 = vpop.f32.mrb[0].mxu0
          %v1566 = vadd.f32 %v1523, %v1565
          %v1567 = vpop.f32.mrb[0].mxu0
          %v1568 = vadd.f32 %v1525, %v1567
          %v1569 = vpop.f32.mrb[0].mxu0
          %v1570 = vadd.f32 %v1527, %v1569
          %1571 = vdwg.mxu0
          %1572 = vmatprep.subr.bf16.mxu0 %v1072
          %1573 = vmatpush1.bf16.msra.mxu0 %v1071
          %1574 = vmatprep.subr.bf16.mxu0 %v1074
          %1575 = vmatpush1.bf16.msra.mxu0 %v1073
          %1576 = vmatprep.subr.bf16.mxu0 %v1076
          %1577 = vmatpush1.bf16.msra.mxu0 %v1075
          %1578 = vmatprep.subr.bf16.mxu0 %v1078
          %1579 = vmatpush1.bf16.msra.mxu0 %v1077
          %1580 = vmatprep.subr.bf16.mxu0 %v1080
          %1581 = vmatpush1.bf16.msra.mxu0 %v1079
          %1582 = vmatprep.subr.bf16.mxu0 %v1082
          %1583 = vmatpush1.bf16.msra.mxu0 %v1081
          %1584 = vmatprep.subr.bf16.mxu0 %v1084
          %1585 = vmatpush1.bf16.msra.mxu0 %v1083
          %1586 = vmatprep.subr.bf16.mxu0 %v1086
          %1587 = vmatpush1.bf16.msra.mxu0 %v1085
          %1588 = vmatprep.subr.bf16.mxu0 %v1088
          %1589 = vmatpush1.bf16.msra.mxu0 %v1087
          %1590 = vmatprep.subr.bf16.mxu0 %v1090
          %1591 = vmatpush1.bf16.msra.mxu0 %v1089
          %1592 = vmatprep.subr.bf16.mxu0 %v1092
          %1593 = vmatpush1.bf16.msra.mxu0 %v1091
          %1594 = vmatprep.subr.bf16.mxu0 %v1094
          %1595 = vmatpush1.bf16.msra.mxu0 %v1093
          %1596 = vmatprep.subr.bf16.mxu0 %v1096
          %1597 = vmatpush1.bf16.msra.mxu0 %v1095
          %1598 = vmatprep.subr.bf16.mxu0 %v1098
          %1599 = vmatpush1.bf16.msra.mxu0 %v1097
          %1600 = vmatprep.subr.bf16.mxu0 %v1100
          %1601 = vmatpush1.bf16.msra.mxu0 %v1099
          %1602 = vmatprep.subr.bf16.mxu0 %v1102
          %1603 = vmatpush1.bf16.msra.mxu0 %v1101
          %1604 = vmatprep.mubr.bf16.mxu0 %v1434
          %1605 = vmatmul.mubr.bf16.gmra.mrb[0].mxu0 %v1433
          %v1606 = vpop.f32.mrb[0].mxu0
          %v1607 = vadd.f32 %v1564, %v1606
          %v1608 = vpop.f32.mrb[0].mxu0
          %v1609 = vadd.f32 %v1566, %v1608
          %v1610 = vpop.f32.mrb[0].mxu0
          %v1611 = vadd.f32 %v1568, %v1610
          %v1612 = vpop.f32.mrb[0].mxu0
          %v1613 = vadd.f32 %v1570, %v1612
          %1614 = vdwg.mxu0
          %v1615 = vadd.f32 %v531, %v1607
          %v1616 = vadd.f32 %v532, %v1609
          %v1617 = vadd.f32 %v533, %v1611
          %v1618 = vadd.f32 %v534, %v1613
          %1619 = vst [vmem:[#allocation2] sm:$0xff] %v1615
          %1620 = vst [vmem:[#allocation2 + $0x8] sm:$0xff] %v1616
          %1621 = vst [vmem:[#allocation2 + $0x10] sm:$0xff] %v1617
          %1622 = vst [vmem:[#allocation2 + $0x18] sm:$0xff] %v1618
        $region56: #{tpu_custom_call.1} parent=35 // pred_fallthru
          _
        %p1623 = scmp.eq.s32.totalorder %s31, 1
        // Predicated region
        $region57: #{tpu_custom_call.1} parent=35 // pred_check
          %p1624 = pneg %p1623
        $region58: #{tpu_custom_call.1} parent=35 // pred_check_branch
          %1626 = sbr.rel (%p1624) target = $region60
        $region59: #{tpu_custom_call.1} parent=35 // pred_region
          %v1627 = vld [vmem:[#allocation2] sm:$0xff]
          %v1628 = vld [vmem:[#allocation2 + $0x8] sm:$0xff]
          %v1629 = vld [vmem:[#allocation2 + $0x10] sm:$0xff]
          %v1630 = vld [vmem:[#allocation2 + $0x18] sm:$0xff]
          %v1631 = vld [vmem:[%s384] sm:$0x3]
          %v1633 = vlaneseq
          %v1634 = vshrl.u32 %v1633, 7
          %v1635 = vsub.s32 0, %v1634
          %v1636 = vrot.slane %v1631, %v1635
          %v1637 = vlaneseq
          %v1638 = vshrl.u32 %v1637, 7
          %v1639 = vsub.s32 1, %v1638
          %v1640 = vrot.slane %v1631, %v1639
          %v1643 = vmul.f32 %v1627, %v1636
          %v1644 = vmul.f32 %v1628, %v1640
          %v1645 = vmul.f32 %v1629, %v1636
          %v1646 = vmul.f32 %v1630, %v1640
          %1647 = vst [vmem:[%s367] sm:$0xff] %v1643
          %1648 = vst [vmem:[%s367 + $0x8] sm:$0xff] %v1644
          %1649 = vst [vmem:[%s367 + $0x10] sm:$0xff] %v1645
          %1650 = vst [vmem:[%s367 + $0x18] sm:$0xff] %v1646
        $region60: #{tpu_custom_call.1} parent=35 // pred_fallthru
          _
        %s1651 = sand.u32 %s181, 1
        %s1652 = scalar_lea.sflag [#allocation5], %s1651
        %s1653 = sand.u32 %s181, 1
        %s1654 = smul.addr %s1653, 32
        %s1655 = scalar_lea.vmem [#allocation9], %s1654
        // Predicated region
        $region61: #{tpu_custom_call.1} parent=35 // pred_check
          %p1656 = pneg %p191
        $region62: #{tpu_custom_call.1} parent=35 // pred_check_branch
          %1658 = sbr.rel (%p1656) target = $region64
        $region63: #{tpu_custom_call.1} parent=35 // pred_region
          %s1659 = smul.u32 2, %s29
          %s1660 = smul.u32 2, %s30
          %s1662 = ssub.s32 512, 512
          %1663 = vsyncadd %s1652, %s1662
          %s1664 = smul.addr %s1659, 6
          %s1665 = sadd.s32 %s1660, %s1664
          %s1666 = smul.addr %s1665, 128
          %s1667 = scalar_lea.hbm %s4, %s1666
          %s1668 = sshll.u32 %s1655, 4
          %s1669 = int_to_ptr.vmem [resolvable:$true] %s1668
          %1674 = dma.vmem_to_hbm [thread:$0]  %s1669, 512, %s1667, %s1652, 256, 768, 16
        $region64: #{tpu_custom_call.1} parent=35 // pred_fallthru
          _
      $region36: #{tpu_custom_call.1} parent=5 // pred_fallthru
        _
      %p1675 = scmp.le.s32.totalorder 2, %s19
      // Predicated region
      $region65: #{tpu_custom_call.1} parent=5 // pred_check
        %p1676 = pneg %p1675
      $region66: #{tpu_custom_call.1} parent=5 // pred_check_branch
        %1678 = sbr.rel (%p1676) target = $region68
      $region67: #{tpu_custom_call.1} parent=5 // pred_region
        %s1679 = ssub.s32 %s19, 2
        // Predicated region
        $region69: #{tpu_custom_call.1} parent=67 // pred_check
          %p1680 = pneg %p197
        $region70: #{tpu_custom_call.1} parent=67 // pred_check_branch
          %1682 = sbr.rel (%p1680) target = $region72
        $region71: #{tpu_custom_call.1} parent=67 // pred_region
          %s1683 = sand.u32 %s182, 1
          %s1684 = scalar_lea.sflag [#allocation5], %s1683
          %s1685 = sand.u32 %s182, 1
          %s1686 = smul.addr %s1685, 32
          %s1687 = scalar_lea.vmem [#allocation9], %s1686
          %1688 = dma.done %s1684, 512
        $region72: #{tpu_custom_call.1} parent=67 // pred_fallthru
          _
      $region68: #{tpu_custom_call.1} parent=5 // pred_fallthru
        _
    $region6: #{tpu_custom_call.1} parent=1 // loop_footer
      %s23 = sadd.s32 1, %s19
    $region7: #{tpu_custom_call.1} parent=1 // loop_footer_branch
      %18 = sbr.rel target = $region3
    $region8: #{tpu_custom_call.1} parent=1 // loop_exit
      _
    %1689 = vsyncpa [#allocation4], 1
    %s1690 = scalar_lea.sflag [#allocation4], 1
    %1691 = vsyncpa %s1690, 1
    %1692 = vsyncpa [#allocation7], 1
    %s1693 = scalar_lea.sflag [#allocation7], 1
    %1694 = vsyncpa %s1693, 1
    %1695 = vsyncpa [#allocation5], 1
    %s1696 = scalar_lea.sflag [#allocation5], 1
    %1697 = vsyncpa %s1696, 1

</llo_original>
